<compile_context>
chip_gen: v7x
topology: tpu7x:2x2x1
jax: 0.10.0
libtpu: 0.0.40
codegen_flags: <defaults>
</compile_context>

<pallas_src>
import functools

import jax
import jax.numpy as jnp
from jax import lax
from jax.experimental import pallas as pl
from jax.experimental.pallas import tpu as pltpu

VMEM = pl.BlockSpec(memory_space=pltpu.MemorySpace.VMEM)
F32 = jnp.float32
BF16 = jnp.bfloat16


# --------------------------------------------------------------------------
# Single fused kernel for the whole forward pass (batch-major rows b*L + l).
# Output is emitted as [B, 3+L, C] (class dim lane-last); the wrapper swaps
# the last two axes to the torch layout [B, C, 3+L] (tiny layout plumbing).
# --------------------------------------------------------------------------
def _fused_model_kernel(
    ids_ref,                 # [N, 1] int32, batch-major rows (b*L + l)
    emb_all_ref,             # [V, 4D] bf16 (explainer | selector | cls | sup)
    # explainer MLP
    ew1_ref, eb1_ref, ew2_ref, eb2_ref, ew3_ref, eb3_ref,
    # selector BiLSTM (gate-interleaved / block layouts built in the wrapper)
    wih_f_ref, wih_b_ref, bih_ref, whh_ref,
    # selector head MLP
    hw1_ref, hb1_ref, hw2_ref, hb2_ref, hw3_ref, hb3_ref,
    # frozen classifier approximator (conv flattened to [K*D, Hc])
    wcv_c_ref, bcv_c_ref, wln_c_ref, bln_c_ref,
    # supervised approximator
    wcv_u_ref, bcv_u_ref, wln_u_ref, bln_u_ref,
    # output [B, 3+L, C]
    o_ref,
    *, B, L, D, K):
  N = B * L
  V = emb_all_ref.shape[0]
  H = whh_ref.shape[0] // 2                 # LSTM hidden per direction

  # ---- all four embedding "gathers" as ONE one-hot matmul (V is tiny) -----
  # TODO(synk): for real vocab sizes keep the tables in HBM and DMA rows via
  # PrefetchScalarGridSpec instead of the one-hot trick (out-of-range ids
  # silently map to a zero embedding here, torch would raise).
  iota_v = lax.broadcasted_iota(jnp.int32, (N, V), 1)
  oh = (ids_ref[...] == iota_v).astype(BF16)                          # [N, V]
  e_all = jnp.dot(oh, emb_all_ref[...], preferred_element_type=F32)   # [N, 4D]
  e_x = e_all[:, 0:D]             # explainer
  e_s = e_all[:, D:2 * D]         # selector
  e_c = e_all[:, 2 * D:3 * D]     # cls approximator
  e_u = e_all[:, 3 * D:4 * D]     # sup approximator

  # ============================== Explainer ================================
  t1 = jnp.maximum(
      jnp.dot(e_x.astype(BF16), ew1_ref[...], preferred_element_type=F32)
      + eb1_ref[...], 0.0)
  t2 = jnp.maximum(
      jnp.dot(t1.astype(BF16), ew2_ref[...], preferred_element_type=F32)
      + eb2_ref[...], 0.0)
  w_tok = (jnp.dot(t2.astype(BF16), ew3_ref[...], preferred_element_type=F32)
           + eb3_ref[...])                                            # [N, C]

  # ========================= Selector: fused BiLSTM ========================
  # Hoisted input projections (one matmul per direction over all timesteps).
  # Gate columns interleaved: [i_f,i_b | f_f,f_b | g_f,g_b | o_f,o_b].
  e_s16 = e_s.astype(BF16)
  xf = (jnp.dot(e_s16, wih_f_ref[...], preferred_element_type=F32)
        + bih_ref[...]).reshape(B, L, 8 * H)
  xb = jnp.dot(e_s16, wih_b_ref[...],
               preferred_element_type=F32).reshape(B, L, 8 * H)

  # NOTE: whh is block-diagonal (half zeros); kept fused while B*H is tiny
  # (latency bound).  TODO(synk): at real H split into two [B,H]x[H,4H] dots.
  h = jnp.zeros((B, 2 * H), F32)
  c = jnp.zeros((B, 2 * H), F32)
  h_fwd = [None] * L
  h_bwd = [None] * L
  for t in range(L):        # static unroll; h/c live in vregs, no VMEM scratch
    xin = xf[:, t, :] + xb[:, L - 1 - t, :]                           # [B, 8H]
    g = jnp.dot(h.astype(BF16), whh_ref[...],
                preferred_element_type=F32) + xin
    i_g = jax.nn.sigmoid(g[:, 0:2 * H])
    f_g = jax.nn.sigmoid(g[:, 2 * H:4 * H])
    g_g = jnp.tanh(g[:, 4 * H:6 * H])
    o_g = jax.nn.sigmoid(g[:, 6 * H:8 * H])
    c = f_g * c + i_g * g_g
    h = o_g * jnp.tanh(c)
    h_fwd[t] = h[:, 0:H]               # fwd hidden at time t
    h_bwd[L - 1 - t] = h[:, H:2 * H]   # bwd hidden at time L-1-t
  # Batch-major [N, 2H] assembled directly -- no NxN permutation matmul.
  h_bm = jnp.concatenate(
      [jnp.stack(h_fwd, axis=1), jnp.stack(h_bwd, axis=1)],
      axis=2).reshape(N, 2 * H)

  # Selector head (eval mode: dropout = identity).
  a1 = jnp.maximum(
      jnp.dot(h_bm.astype(BF16), hw1_ref[...], preferred_element_type=F32)
      + hb1_ref[...], 0.0)
  a2 = jnp.maximum(
      jnp.dot(a1.astype(BF16), hw2_ref[...], preferred_element_type=F32)
      + hb2_ref[...], 0.0)
  z_bm = jax.nn.sigmoid(
      jnp.dot(a2.astype(BF16), hw3_ref[...], preferred_element_type=F32)
      + hb3_ref[...])                                                 # [N, 1]

  # ===================== Approximators (cls + sup fused) ===================
  pad = (K - 1) // 2
  row_l = lax.broadcasted_iota(jnp.int32, (N, D), 0) % L
  # im2col boundary masks hoisted: built once, shared by both approximators.
  masks = {}
  for k in range(K):
    d = k - pad
    if d != 0:
      masks[d] = jnp.logical_and(row_l + d >= 0, row_l + d < L)

  def approximator(e, wcv_ref, bcv_ref, wln_ref, bln_ref):
    x = e * z_bm                                                      # [N, D]
    cols = []
    for k in range(K):          # im2col: roll + boundary mask, all in VMEM
      d = k - pad
      if d == 0:
        cols.append(x)
      else:
        # TODO(synk): pltpu.roll would put this shift on the (idle) XLU slot;
        # jnp.roll keeps exact wrap semantics and lowers on every chip.
        cols.append(jnp.where(masks[d], jnp.roll(x, -d, axis=0), 0.0))
    xcat = jnp.concatenate(cols, axis=1).astype(BF16)                 # [N, K*D]
    conv = jnp.maximum(
        jnp.dot(xcat, wcv_ref[...], preferred_element_type=F32)
        + bcv_ref[...], 0.0)                                          # [N, Ha]
    pooled = jnp.max(conv.reshape(B, L, conv.shape[-1]), axis=1)      # [B, Ha]
    logits = (jnp.dot(pooled.astype(BF16), wln_ref[...],
                      preferred_element_type=F32) + bln_ref[...])     # [B, C]
    m = jnp.max(logits, axis=-1, keepdims=True)
    ex = jnp.exp(logits - m)
    return ex / jnp.sum(ex, axis=-1, keepdims=True)

  y1 = approximator(e_c, wcv_c_ref, bcv_c_ref, wln_c_ref, bln_c_ref)
  y2 = approximator(e_u, wcv_u_ref, bcv_u_ref, wln_u_ref, bln_u_ref)

  # ============ Combine: softmax(W @ Z over class dim) + concat ============
  C = w_tok.shape[-1]
  s = jnp.sum((w_tok * z_bm).reshape(B, L, C), axis=1)                # [B, C]
  s = s - jnp.max(s, axis=-1, keepdims=True)
  es = jnp.exp(s)
  sm = es / jnp.sum(es, axis=-1, keepdims=True)

  out = jnp.concatenate(
      [sm[:, None, :], y1[:, None, :], y2[:, None, :],
       w_tok.reshape(B, L, C)], axis=1)                               # [B,3+L,C]
  o_ref[...] = out                                                    # 1 store


# --------------------------------------------------------------------------
# Wrapper: weight layout plumbing + single pallas_call.
# --------------------------------------------------------------------------
def _interleave_gates(a_fwd, a_bwd):
  """[..., 4H] per direction (torch gate order i,f,g,o) -> [..., 8H] laid out
  [i_f, i_b, f_f, f_b, g_f, g_b, o_f, o_b]."""
  h = a_fwd.shape[-1] // 4
  f4 = a_fwd.reshape(a_fwd.shape[:-1] + (4, h))
  b4 = a_bwd.reshape(a_bwd.shape[:-1] + (4, h))
  return jnp.concatenate([f4, b4], axis=-1).reshape(a_fwd.shape[:-1] + (8 * h,))


def model_forward(x_tok, params, in_kernel):
  B, L = x_tok.shape
  N = B * L

  expl = params["explainer"]
  emb_s, (wi_f, wh_f, b_f, wi_b, wh_b, b_b), head = params["selector"]
  emb_c, wcv_c3, bcv_c, wln_c, bln_c = params["cls"]
  emb_u, wcv_u3, bcv_u, wln_u, bln_u = params["sup"]

  D = expl[0].shape[1]
  C = expl[5].shape[1]

  ids = x_tok.reshape(N, 1).astype(jnp.int32)       # batch-major rows b*L + l

  # All four embedding tables fused along lanes -> one in-kernel matmul.
  emb_all = jnp.concatenate([expl[0], emb_s, emb_c, emb_u], axis=1).astype(BF16)

  # Gate-interleaved input projections / bias, block recurrence matrix.
  wih_f_full = _interleave_gates(wi_f, jnp.zeros_like(wi_b)).astype(BF16)
  wih_b_full = _interleave_gates(jnp.zeros_like(wi_f), wi_b).astype(BF16)
  bih_full = _interleave_gates(b_f, b_b)                               # f32
  whh_blk = jnp.concatenate(
      [_interleave_gates(wh_f, jnp.zeros_like(wh_b)),
       _interleave_gates(jnp.zeros_like(wh_f), wh_b)], axis=0).astype(BF16)

  def conv_flat(w):   # [K, D, H] tap-major -> [K*D, H]
    k, d, h = w.shape
    return w.reshape(k * d, h).astype(BF16)

  args = (
      ids, emb_all,
      expl[1].astype(BF16), expl[2], expl[3].astype(BF16), expl[4],
      expl[5].astype(BF16), expl[6],
      wih_f_full, wih_b_full, bih_full, whh_blk,
      head[0].astype(BF16), head[1], head[2].astype(BF16), head[3],
      head[4].astype(BF16), head[5],
      conv_flat(wcv_c3), bcv_c, wln_c.astype(BF16), bln_c,
      conv_flat(wcv_u3), bcv_u, wln_u.astype(BF16), bln_u,
  )

  kernel = functools.partial(_fused_model_kernel, B=B, L=L, D=D, K=in_kernel)
  out_t = pl.pallas_call(
      kernel,
      out_shape=jax.ShapeDtypeStruct((B, 3 + L, C), jnp.float32),
      in_specs=[VMEM] * len(args),
      out_specs=VMEM,
      compiler_params=pltpu.CompilerParams(vmem_limit_bytes=32 * 1024 * 1024),
  )(*args)
  # TODO(synk): at real sizes add a row-block grid with dimension_semantics=
  # ("parallel",) (mandatory to use v7x's second TensorCore) and re-budget the
  # resident weights + activations against 64 MiB physical / 32 MiB scoped.
  return jnp.swapaxes(out_t, 1, 2)                  # [B, C, 3+L] (torch layout)


# --------------------------------------------------------------------------
# Deterministic parameter construction (fresh weights; torch porting would
# transpose Linear/Conv weights into these x@W layouts and sum b_ih + b_hh).
# --------------------------------------------------------------------------
def _init(key, shape, scale=0.1):
  return scale * jax.random.normal(key, shape, dtype=jnp.float32)


def make_params(key, V, D, L, C, HS, HE, HU, HC, K):
  ks = iter(jax.random.split(key, 64))

  explainer = (
      _init(next(ks), (V, D)),
      _init(next(ks), (D, HE)), _init(next(ks), (1, HE)),
      _init(next(ks), (HE, HE)), _init(next(ks), (1, HE)),
      _init(next(ks), (HE, C)), _init(next(ks), (1, C)),
  )

  lstm = (
      _init(next(ks), (D, 4 * HS)),   # W_ih fwd (x @ W layout, gate order i,f,g,o)
      _init(next(ks), (HS, 4 * HS)),  # W_hh fwd
      _init(next(ks), (1, 4 * HS)),   # b_ih + b_hh fwd
      _init(next(ks), (D, 4 * HS)),   # W_ih bwd
      _init(next(ks), (HS, 4 * HS)),  # W_hh bwd
      _init(next(ks), (1, 4 * HS)),   # b_ih + b_hh bwd
  )
  sel_head = (
      _init(next(ks), (2 * HS, HS)), _init(next(ks), (1, HS)),
      _init(next(ks), (HS, HS)), _init(next(ks), (1, HS)),
      _init(next(ks), (HS, 1)), _init(next(ks), (1, 1)),
  )
  selector = (_init(next(ks), (V, D)), lstm, sel_head)

  def approx_params(H):
    return (
        _init(next(ks), (V, D)),        # embedding
        _init(next(ks), (K, D, H)),     # conv weight, tap-major [K, D, H]
        _init(next(ks), (1, H)),        # conv bias
        _init(next(ks), (H, C)),        # linear weight
        _init(next(ks), (1, C)),        # linear bias
    )

  return {
      "explainer": explainer,
      "selector": selector,
      "cls": approx_params(HC),
      "sup": approx_params(HU),
  }


if __name__ == "__main__":
  V, D, L, C = 32, 16, 8, 4
  HS, HE, HU, HC = 16, 16, 16, 16
  in_kernel = 3
  B = 2

  key = jax.random.PRNGKey(0)
  k_tok, k_par = jax.random.split(key)
  x = jax.random.randint(k_tok, (B, L), 0, V, dtype=jnp.int32)
  params = make_params(k_par, V, D, L, C, HS, HE, HU, HC, in_kernel)

  fwd = jax.jit(model_forward, static_argnums=(2,))
  out = fwd(x, params, in_kernel)
  out = jax.block_until_ready(out)

  assert out.shape == (B, C, 3 + L), out.shape
  assert out.dtype == jnp.float32
  print("KERNEL_OK")
</pallas_src>

<mosaic_0001>
module attributes {stable_mosaic.version = 11 : i64} {
  func.func @_fused_model_kernel(%arg0: memref<16x1xi32, #tpu.memory_space<vmem>>, %arg1: memref<32x64xbf16, #tpu.memory_space<vmem>>, %arg2: memref<16x16xbf16, #tpu.memory_space<vmem>>, %arg3: memref<1x16xf32, #tpu.memory_space<vmem>>, %arg4: memref<16x16xbf16, #tpu.memory_space<vmem>>, %arg5: memref<1x16xf32, #tpu.memory_space<vmem>>, %arg6: memref<16x4xbf16, #tpu.memory_space<vmem>>, %arg7: memref<1x4xf32, #tpu.memory_space<vmem>>, %arg8: memref<16x128xbf16, #tpu.memory_space<vmem>>, %arg9: memref<16x128xbf16, #tpu.memory_space<vmem>>, %arg10: memref<1x128xf32, #tpu.memory_space<vmem>>, %arg11: memref<32x128xbf16, #tpu.memory_space<vmem>>, %arg12: memref<32x16xbf16, #tpu.memory_space<vmem>>, %arg13: memref<1x16xf32, #tpu.memory_space<vmem>>, %arg14: memref<16x16xbf16, #tpu.memory_space<vmem>>, %arg15: memref<1x16xf32, #tpu.memory_space<vmem>>, %arg16: memref<16x1xbf16, #tpu.memory_space<vmem>>, %arg17: memref<1x1xf32, #tpu.memory_space<vmem>>, %arg18: memref<48x16xbf16, #tpu.memory_space<vmem>>, %arg19: memref<1x16xf32, #tpu.memory_space<vmem>>, %arg20: memref<16x4xbf16, #tpu.memory_space<vmem>>, %arg21: memref<1x4xf32, #tpu.memory_space<vmem>>, %arg22: memref<48x16xbf16, #tpu.memory_space<vmem>>, %arg23: memref<1x16xf32, #tpu.memory_space<vmem>>, %arg24: memref<16x4xbf16, #tpu.memory_space<vmem>>, %arg25: memref<1x4xf32, #tpu.memory_space<vmem>>, %arg26: memref<2x11x4xf32, #tpu.memory_space<vmem>>) attributes {dimension_semantics = [], scalar_prefetch = 0 : i64, scratch_operands = 0 : i64, tpu.core_type = #tpu.core_type<tc>} {
    %0 = tpu.iota {dimensions = array<i32: 1>} : vector<16x32xi32>
    %c0 = arith.constant 0 : index
    %c0_0 = arith.constant 0 : index
    %1 = vector.load %arg0[%c0, %c0_0] : memref<16x1xi32, #tpu.memory_space<vmem>>, vector<16x1xi32>
    %2 = vector.broadcast %1 : vector<16x1xi32> to vector<16x32xi32>
    %3 = arith.cmpi eq, %2, %0 : vector<16x32xi32>
    %4 = arith.extui %3 : vector<16x32xi1> to vector<16x32xi32>
    %5 = arith.sitofp %4 : vector<16x32xi32> to vector<16x32xf32>
    %6 = arith.truncf %5 : vector<16x32xf32> to vector<16x32xbf16>
    %c0_1 = arith.constant 0 : index
    %c0_2 = arith.constant 0 : index
    %7 = vector.load %arg1[%c0_1, %c0_2] : memref<32x64xbf16, #tpu.memory_space<vmem>>, vector<32x64xbf16>
    %cst = arith.constant dense<0.000000e+00> : vector<16x64xf32>
    %8 = tpu.matmul %6, %7, %cst {dimension_numbers = #tpu.dot_dimension_numbers<[1], [0], [0], [1], [0, 0, 1, 1], [], []>} : vector<16x32xbf16>, vector<32x64xbf16>, vector<16x64xf32> -> vector<16x64xf32>
    %9 = vector.extract_strided_slice %8 {offsets = [0, 0], sizes = [16, 16], strides = [1, 1]} : vector<16x64xf32> to vector<16x16xf32>
    %10 = vector.extract_strided_slice %8 {offsets = [0, 16], sizes = [16, 16], strides = [1, 1]} : vector<16x64xf32> to vector<16x16xf32>
    %11 = vector.extract_strided_slice %8 {offsets = [0, 32], sizes = [16, 16], strides = [1, 1]} : vector<16x64xf32> to vector<16x16xf32>
    %12 = vector.extract_strided_slice %8 {offsets = [0, 48], sizes = [16, 16], strides = [1, 1]} : vector<16x64xf32> to vector<16x16xf32>
    %13 = arith.truncf %9 : vector<16x16xf32> to vector<16x16xbf16>
    %c0_3 = arith.constant 0 : index
    %c0_4 = arith.constant 0 : index
    %14 = vector.load %arg2[%c0_3, %c0_4] : memref<16x16xbf16, #tpu.memory_space<vmem>>, vector<16x16xbf16>
    %cst_5 = arith.constant dense<0.000000e+00> : vector<16x16xf32>
    %15 = tpu.matmul %13, %14, %cst_5 {dimension_numbers = #tpu.dot_dimension_numbers<[1], [0], [0], [1], [0, 0, 1, 1], [], []>} : vector<16x16xbf16>, vector<16x16xbf16>, vector<16x16xf32> -> vector<16x16xf32>
    %c0_6 = arith.constant 0 : index
    %c0_7 = arith.constant 0 : index
    %16 = vector.load %arg3[%c0_6, %c0_7] : memref<1x16xf32, #tpu.memory_space<vmem>>, vector<1x16xf32>
    %17 = vector.broadcast %16 : vector<1x16xf32> to vector<16x16xf32>
    %18 = arith.addf %15, %17 : vector<16x16xf32>
    %cst_8 = arith.constant 0.000000e+00 : f32
    %19 = vector.broadcast %cst_8 : f32 to vector<16x16xf32>
    %20 = arith.maximumf %18, %19 : vector<16x16xf32>
    %21 = arith.truncf %20 : vector<16x16xf32> to vector<16x16xbf16>
    %c0_9 = arith.constant 0 : index
    %c0_10 = arith.constant 0 : index
    %22 = vector.load %arg4[%c0_9, %c0_10] : memref<16x16xbf16, #tpu.memory_space<vmem>>, vector<16x16xbf16>
    %cst_11 = arith.constant dense<0.000000e+00> : vector<16x16xf32>
    %23 = tpu.matmul %21, %22, %cst_11 {dimension_numbers = #tpu.dot_dimension_numbers<[1], [0], [0], [1], [0, 0, 1, 1], [], []>} : vector<16x16xbf16>, vector<16x16xbf16>, vector<16x16xf32> -> vector<16x16xf32>
    %c0_12 = arith.constant 0 : index
    %c0_13 = arith.constant 0 : index
    %24 = vector.load %arg5[%c0_12, %c0_13] : memref<1x16xf32, #tpu.memory_space<vmem>>, vector<1x16xf32>
    %25 = vector.broadcast %24 : vector<1x16xf32> to vector<16x16xf32>
    %26 = arith.addf %23, %25 : vector<16x16xf32>
    %cst_14 = arith.constant 0.000000e+00 : f32
    %27 = vector.broadcast %cst_14 : f32 to vector<16x16xf32>
    %28 = arith.maximumf %26, %27 : vector<16x16xf32>
    %29 = arith.truncf %28 : vector<16x16xf32> to vector<16x16xbf16>
    %c0_15 = arith.constant 0 : index
    %c0_16 = arith.constant 0 : index
    %30 = vector.load %arg6[%c0_15, %c0_16] : memref<16x4xbf16, #tpu.memory_space<vmem>>, vector<16x4xbf16>
    %cst_17 = arith.constant dense<0.000000e+00> : vector<16x4xf32>
    %31 = tpu.matmul %29, %30, %cst_17 {dimension_numbers = #tpu.dot_dimension_numbers<[1], [0], [0], [1], [0, 0, 1, 1], [], []>} : vector<16x16xbf16>, vector<16x4xbf16>, vector<16x4xf32> -> vector<16x4xf32>
    %c0_18 = arith.constant 0 : index
    %c0_19 = arith.constant 0 : index
    %32 = vector.load %arg7[%c0_18, %c0_19] : memref<1x4xf32, #tpu.memory_space<vmem>>, vector<1x4xf32>
    %33 = vector.broadcast %32 : vector<1x4xf32> to vector<16x4xf32>
    %34 = arith.addf %31, %33 : vector<16x4xf32>
    %35 = arith.truncf %10 : vector<16x16xf32> to vector<16x16xbf16>
    %c0_20 = arith.constant 0 : index
    %c0_21 = arith.constant 0 : index
    %36 = vector.load %arg8[%c0_20, %c0_21] : memref<16x128xbf16, #tpu.memory_space<vmem>>, vector<16x128xbf16>
    %cst_22 = arith.constant dense<0.000000e+00> : vector<16x128xf32>
    %37 = tpu.matmul %35, %36, %cst_22 {dimension_numbers = #tpu.dot_dimension_numbers<[1], [0], [0], [1], [0, 0, 1, 1], [], []>} : vector<16x16xbf16>, vector<16x128xbf16>, vector<16x128xf32> -> vector<16x128xf32>
    %c0_23 = arith.constant 0 : index
    %c0_24 = arith.constant 0 : index
    %38 = vector.load %arg10[%c0_23, %c0_24] : memref<1x128xf32, #tpu.memory_space<vmem>>, vector<1x128xf32>
    %39 = vector.broadcast %38 : vector<1x128xf32> to vector<16x128xf32>
    %40 = arith.addf %37, %39 : vector<16x128xf32>
    %41 = vector.shape_cast %40 : vector<16x128xf32> to vector<2x8x128xf32>
    %c0_25 = arith.constant 0 : index
    %c0_26 = arith.constant 0 : index
    %42 = vector.load %arg9[%c0_25, %c0_26] : memref<16x128xbf16, #tpu.memory_space<vmem>>, vector<16x128xbf16>
    %cst_27 = arith.constant dense<0.000000e+00> : vector<16x128xf32>
    %43 = tpu.matmul %35, %42, %cst_27 {dimension_numbers = #tpu.dot_dimension_numbers<[1], [0], [0], [1], [0, 0, 1, 1], [], []>} : vector<16x16xbf16>, vector<16x128xbf16>, vector<16x128xf32> -> vector<16x128xf32>
    %44 = vector.shape_cast %43 : vector<16x128xf32> to vector<2x8x128xf32>
    %cst_28 = arith.constant 0.000000e+00 : f32
    %45 = vector.broadcast %cst_28 : f32 to vector<2x32xf32>
    %cst_29 = arith.constant 0.000000e+00 : f32
    %46 = vector.broadcast %cst_29 : f32 to vector<2x32xf32>
    %47 = vector.extract_strided_slice %41 {offsets = [0, 0, 0], sizes = [2, 1, 128], strides = [1, 1, 1]} : vector<2x8x128xf32> to vector<2x1x128xf32>
    %48 = vector.shape_cast %47 : vector<2x1x128xf32> to vector<2x128xf32>
    %49 = vector.extract_strided_slice %44 {offsets = [0, 7, 0], sizes = [2, 1, 128], strides = [1, 1, 1]} : vector<2x8x128xf32> to vector<2x1x128xf32>
    %50 = vector.shape_cast %49 : vector<2x1x128xf32> to vector<2x128xf32>
    %51 = arith.addf %48, %50 : vector<2x128xf32>
    %52 = arith.truncf %45 : vector<2x32xf32> to vector<2x32xbf16>
    %c0_30 = arith.constant 0 : index
    %c0_31 = arith.constant 0 : index
    %53 = vector.load %arg11[%c0_30, %c0_31] : memref<32x128xbf16, #tpu.memory_space<vmem>>, vector<32x128xbf16>
    %cst_32 = arith.constant dense<0.000000e+00> : vector<2x128xf32>
    %54 = tpu.matmul %52, %53, %cst_32 {dimension_numbers = #tpu.dot_dimension_numbers<[1], [0], [0], [1], [0, 0, 1, 1], [], []>} : vector<2x32xbf16>, vector<32x128xbf16>, vector<2x128xf32> -> vector<2x128xf32>
    %55 = arith.addf %54, %51 : vector<2x128xf32>
    %56 = vector.extract_strided_slice %55 {offsets = [0, 0], sizes = [2, 32], strides = [1, 1]} : vector<2x128xf32> to vector<2x32xf32>
    %57 = arith.negf %56 : vector<2x32xf32>
    %58 = math.exp %57 : vector<2x32xf32>
    %cst_33 = arith.constant 1.000000e+00 : f32
    %59 = vector.broadcast %cst_33 : f32 to vector<2x32xf32>
    %60 = arith.addf %59, %58 : vector<2x32xf32>
    %61 = arith.divf %59, %60 : vector<2x32xf32>
    %62 = vector.extract_strided_slice %55 {offsets = [0, 32], sizes = [2, 32], strides = [1, 1]} : vector<2x128xf32> to vector<2x32xf32>
    %63 = arith.negf %62 : vector<2x32xf32>
    %64 = math.exp %63 : vector<2x32xf32>
    %cst_34 = arith.constant 1.000000e+00 : f32
    %65 = vector.broadcast %cst_34 : f32 to vector<2x32xf32>
    %66 = arith.addf %65, %64 : vector<2x32xf32>
    %67 = arith.divf %65, %66 : vector<2x32xf32>
    %68 = vector.extract_strided_slice %55 {offsets = [0, 64], sizes = [2, 32], strides = [1, 1]} : vector<2x128xf32> to vector<2x32xf32>
    %69 = math.tanh %68 : vector<2x32xf32>
    %70 = vector.extract_strided_slice %55 {offsets = [0, 96], sizes = [2, 32], strides = [1, 1]} : vector<2x128xf32> to vector<2x32xf32>
    %71 = arith.negf %70 : vector<2x32xf32>
    %72 = math.exp %71 : vector<2x32xf32>
    %cst_35 = arith.constant 1.000000e+00 : f32
    %73 = vector.broadcast %cst_35 : f32 to vector<2x32xf32>
    %74 = arith.addf %73, %72 : vector<2x32xf32>
    %75 = arith.divf %73, %74 : vector<2x32xf32>
    %76 = arith.mulf %67, %46 : vector<2x32xf32>
    %77 = arith.mulf %61, %69 : vector<2x32xf32>
    %78 = arith.addf %76, %77 : vector<2x32xf32>
    %79 = math.tanh %78 : vector<2x32xf32>
    %80 = arith.mulf %75, %79 : vector<2x32xf32>
    %81 = vector.extract_strided_slice %80 {offsets = [0, 0], sizes = [2, 16], strides = [1, 1]} : vector<2x32xf32> to vector<2x16xf32>
    %82 = vector.extract_strided_slice %80 {offsets = [0, 16], sizes = [2, 16], strides = [1, 1]} : vector<2x32xf32> to vector<2x16xf32>
    %83 = vector.extract_strided_slice %41 {offsets = [0, 1, 0], sizes = [2, 1, 128], strides = [1, 1, 1]} : vector<2x8x128xf32> to vector<2x1x128xf32>
    %84 = vector.shape_cast %83 : vector<2x1x128xf32> to vector<2x128xf32>
    %85 = vector.extract_strided_slice %44 {offsets = [0, 6, 0], sizes = [2, 1, 128], strides = [1, 1, 1]} : vector<2x8x128xf32> to vector<2x1x128xf32>
    %86 = vector.shape_cast %85 : vector<2x1x128xf32> to vector<2x128xf32>
    %87 = arith.addf %84, %86 : vector<2x128xf32>
    %88 = arith.truncf %80 : vector<2x32xf32> to vector<2x32xbf16>
    %c0_36 = arith.constant 0 : index
    %c0_37 = arith.constant 0 : index
    %89 = vector.load %arg11[%c0_36, %c0_37] : memref<32x128xbf16, #tpu.memory_space<vmem>>, vector<32x128xbf16>
    %cst_38 = arith.constant dense<0.000000e+00> : vector<2x128xf32>
    %90 = tpu.matmul %88, %89, %cst_38 {dimension_numbers = #tpu.dot_dimension_numbers<[1], [0], [0], [1], [0, 0, 1, 1], [], []>} : vector<2x32xbf16>, vector<32x128xbf16>, vector<2x128xf32> -> vector<2x128xf32>
    %91 = arith.addf %90, %87 : vector<2x128xf32>
    %92 = vector.extract_strided_slice %91 {offsets = [0, 0], sizes = [2, 32], strides = [1, 1]} : vector<2x128xf32> to vector<2x32xf32>
    %93 = arith.negf %92 : vector<2x32xf32>
    %94 = math.exp %93 : vector<2x32xf32>
    %cst_39 = arith.constant 1.000000e+00 : f32
    %95 = vector.broadcast %cst_39 : f32 to vector<2x32xf32>
    %96 = arith.addf %95, %94 : vector<2x32xf32>
    %97 = arith.divf %95, %96 : vector<2x32xf32>
    %98 = vector.extract_strided_slice %91 {offsets = [0, 32], sizes = [2, 32], strides = [1, 1]} : vector<2x128xf32> to vector<2x32xf32>
    %99 = arith.negf %98 : vector<2x32xf32>
    %100 = math.exp %99 : vector<2x32xf32>
    %cst_40 = arith.constant 1.000000e+00 : f32
    %101 = vector.broadcast %cst_40 : f32 to vector<2x32xf32>
    %102 = arith.addf %101, %100 : vector<2x32xf32>
    %103 = arith.divf %101, %102 : vector<2x32xf32>
    %104 = vector.extract_strided_slice %91 {offsets = [0, 64], sizes = [2, 32], strides = [1, 1]} : vector<2x128xf32> to vector<2x32xf32>
    %105 = math.tanh %104 : vector<2x32xf32>
    %106 = vector.extract_strided_slice %91 {offsets = [0, 96], sizes = [2, 32], strides = [1, 1]} : vector<2x128xf32> to vector<2x32xf32>
    %107 = arith.negf %106 : vector<2x32xf32>
    %108 = math.exp %107 : vector<2x32xf32>
    %cst_41 = arith.constant 1.000000e+00 : f32
    %109 = vector.broadcast %cst_41 : f32 to vector<2x32xf32>
    %110 = arith.addf %109, %108 : vector<2x32xf32>
    %111 = arith.divf %109, %110 : vector<2x32xf32>
    %112 = arith.mulf %103, %78 : vector<2x32xf32>
    %113 = arith.mulf %97, %105 : vector<2x32xf32>
    %114 = arith.addf %112, %113 : vector<2x32xf32>
    %115 = math.tanh %114 : vector<2x32xf32>
    %116 = arith.mulf %111, %115 : vector<2x32xf32>
    %117 = vector.extract_strided_slice %116 {offsets = [0, 0], sizes = [2, 16], strides = [1, 1]} : vector<2x32xf32> to vector<2x16xf32>
    %118 = vector.extract_strided_slice %116 {offsets = [0, 16], sizes = [2, 16], strides = [1, 1]} : vector<2x32xf32> to vector<2x16xf32>
    %119 = vector.extract_strided_slice %41 {offsets = [0, 2, 0], sizes = [2, 1, 128], strides = [1, 1, 1]} : vector<2x8x128xf32> to vector<2x1x128xf32>
    %120 = vector.shape_cast %119 : vector<2x1x128xf32> to vector<2x128xf32>
    %121 = vector.extract_strided_slice %44 {offsets = [0, 5, 0], sizes = [2, 1, 128], strides = [1, 1, 1]} : vector<2x8x128xf32> to vector<2x1x128xf32>
    %122 = vector.shape_cast %121 : vector<2x1x128xf32> to vector<2x128xf32>
    %123 = arith.addf %120, %122 : vector<2x128xf32>
    %124 = arith.truncf %116 : vector<2x32xf32> to vector<2x32xbf16>
    %c0_42 = arith.constant 0 : index
    %c0_43 = arith.constant 0 : index
    %125 = vector.load %arg11[%c0_42, %c0_43] : memref<32x128xbf16, #tpu.memory_space<vmem>>, vector<32x128xbf16>
    %cst_44 = arith.constant dense<0.000000e+00> : vector<2x128xf32>
    %126 = tpu.matmul %124, %125, %cst_44 {dimension_numbers = #tpu.dot_dimension_numbers<[1], [0], [0], [1], [0, 0, 1, 1], [], []>} : vector<2x32xbf16>, vector<32x128xbf16>, vector<2x128xf32> -> vector<2x128xf32>
    %127 = arith.addf %126, %123 : vector<2x128xf32>
    %128 = vector.extract_strided_slice %127 {offsets = [0, 0], sizes = [2, 32], strides = [1, 1]} : vector<2x128xf32> to vector<2x32xf32>
    %129 = arith.negf %128 : vector<2x32xf32>
    %130 = math.exp %129 : vector<2x32xf32>
    %cst_45 = arith.constant 1.000000e+00 : f32
    %131 = vector.broadcast %cst_45 : f32 to vector<2x32xf32>
    %132 = arith.addf %131, %130 : vector<2x32xf32>
    %133 = arith.divf %131, %132 : vector<2x32xf32>
    %134 = vector.extract_strided_slice %127 {offsets = [0, 32], sizes = [2, 32], strides = [1, 1]} : vector<2x128xf32> to vector<2x32xf32>
    %135 = arith.negf %134 : vector<2x32xf32>
    %136 = math.exp %135 : vector<2x32xf32>
    %cst_46 = arith.constant 1.000000e+00 : f32
    %137 = vector.broadcast %cst_46 : f32 to vector<2x32xf32>
    %138 = arith.addf %137, %136 : vector<2x32xf32>
    %139 = arith.divf %137, %138 : vector<2x32xf32>
    %140 = vector.extract_strided_slice %127 {offsets = [0, 64], sizes = [2, 32], strides = [1, 1]} : vector<2x128xf32> to vector<2x32xf32>
    %141 = math.tanh %140 : vector<2x32xf32>
    %142 = vector.extract_strided_slice %127 {offsets = [0, 96], sizes = [2, 32], strides = [1, 1]} : vector<2x128xf32> to vector<2x32xf32>
    %143 = arith.negf %142 : vector<2x32xf32>
    %144 = math.exp %143 : vector<2x32xf32>
    %cst_47 = arith.constant 1.000000e+00 : f32
    %145 = vector.broadcast %cst_47 : f32 to vector<2x32xf32>
    %146 = arith.addf %145, %144 : vector<2x32xf32>
    %147 = arith.divf %145, %146 : vector<2x32xf32>
    %148 = arith.mulf %139, %114 : vector<2x32xf32>
    %149 = arith.mulf %133, %141 : vector<2x32xf32>
    %150 = arith.addf %148, %149 : vector<2x32xf32>
    %151 = math.tanh %150 : vector<2x32xf32>
    %152 = arith.mulf %147, %151 : vector<2x32xf32>
    %153 = vector.extract_strided_slice %152 {offsets = [0, 0], sizes = [2, 16], strides = [1, 1]} : vector<2x32xf32> to vector<2x16xf32>
    %154 = vector.extract_strided_slice %152 {offsets = [0, 16], sizes = [2, 16], strides = [1, 1]} : vector<2x32xf32> to vector<2x16xf32>
    %155 = vector.extract_strided_slice %41 {offsets = [0, 3, 0], sizes = [2, 1, 128], strides = [1, 1, 1]} : vector<2x8x128xf32> to vector<2x1x128xf32>
    %156 = vector.shape_cast %155 : vector<2x1x128xf32> to vector<2x128xf32>
    %157 = vector.extract_strided_slice %44 {offsets = [0, 4, 0], sizes = [2, 1, 128], strides = [1, 1, 1]} : vector<2x8x128xf32> to vector<2x1x128xf32>
    %158 = vector.shape_cast %157 : vector<2x1x128xf32> to vector<2x128xf32>
    %159 = arith.addf %156, %158 : vector<2x128xf32>
    %160 = arith.truncf %152 : vector<2x32xf32> to vector<2x32xbf16>
    %c0_48 = arith.constant 0 : index
    %c0_49 = arith.constant 0 : index
    %161 = vector.load %arg11[%c0_48, %c0_49] : memref<32x128xbf16, #tpu.memory_space<vmem>>, vector<32x128xbf16>
    %cst_50 = arith.constant dense<0.000000e+00> : vector<2x128xf32>
    %162 = tpu.matmul %160, %161, %cst_50 {dimension_numbers = #tpu.dot_dimension_numbers<[1], [0], [0], [1], [0, 0, 1, 1], [], []>} : vector<2x32xbf16>, vector<32x128xbf16>, vector<2x128xf32> -> vector<2x128xf32>
    %163 = arith.addf %162, %159 : vector<2x128xf32>
    %164 = vector.extract_strided_slice %163 {offsets = [0, 0], sizes = [2, 32], strides = [1, 1]} : vector<2x128xf32> to vector<2x32xf32>
    %165 = arith.negf %164 : vector<2x32xf32>
    %166 = math.exp %165 : vector<2x32xf32>
    %cst_51 = arith.constant 1.000000e+00 : f32
    %167 = vector.broadcast %cst_51 : f32 to vector<2x32xf32>
    %168 = arith.addf %167, %166 : vector<2x32xf32>
    %169 = arith.divf %167, %168 : vector<2x32xf32>
    %170 = vector.extract_strided_slice %163 {offsets = [0, 32], sizes = [2, 32], strides = [1, 1]} : vector<2x128xf32> to vector<2x32xf32>
    %171 = arith.negf %170 : vector<2x32xf32>
    %172 = math.exp %171 : vector<2x32xf32>
    %cst_52 = arith.constant 1.000000e+00 : f32
    %173 = vector.broadcast %cst_52 : f32 to vector<2x32xf32>
    %174 = arith.addf %173, %172 : vector<2x32xf32>
    %175 = arith.divf %173, %174 : vector<2x32xf32>
    %176 = vector.extract_strided_slice %163 {offsets = [0, 64], sizes = [2, 32], strides = [1, 1]} : vector<2x128xf32> to vector<2x32xf32>
    %177 = math.tanh %176 : vector<2x32xf32>
    %178 = vector.extract_strided_slice %163 {offsets = [0, 96], sizes = [2, 32], strides = [1, 1]} : vector<2x128xf32> to vector<2x32xf32>
    %179 = arith.negf %178 : vector<2x32xf32>
    %180 = math.exp %179 : vector<2x32xf32>
    %cst_53 = arith.constant 1.000000e+00 : f32
    %181 = vector.broadcast %cst_53 : f32 to vector<2x32xf32>
    %182 = arith.addf %181, %180 : vector<2x32xf32>
    %183 = arith.divf %181, %182 : vector<2x32xf32>
    %184 = arith.mulf %175, %150 : vector<2x32xf32>
    %185 = arith.mulf %169, %177 : vector<2x32xf32>
    %186 = arith.addf %184, %185 : vector<2x32xf32>
    %187 = math.tanh %186 : vector<2x32xf32>
    %188 = arith.mulf %183, %187 : vector<2x32xf32>
    %189 = vector.extract_strided_slice %188 {offsets = [0, 0], sizes = [2, 16], strides = [1, 1]} : vector<2x32xf32> to vector<2x16xf32>
    %190 = vector.extract_strided_slice %188 {offsets = [0, 16], sizes = [2, 16], strides = [1, 1]} : vector<2x32xf32> to vector<2x16xf32>
    %191 = vector.extract_strided_slice %41 {offsets = [0, 4, 0], sizes = [2, 1, 128], strides = [1, 1, 1]} : vector<2x8x128xf32> to vector<2x1x128xf32>
    %192 = vector.shape_cast %191 : vector<2x1x128xf32> to vector<2x128xf32>
    %193 = vector.extract_strided_slice %44 {offsets = [0, 3, 0], sizes = [2, 1, 128], strides = [1, 1, 1]} : vector<2x8x128xf32> to vector<2x1x128xf32>
    %194 = vector.shape_cast %193 : vector<2x1x128xf32> to vector<2x128xf32>
    %195 = arith.addf %192, %194 : vector<2x128xf32>
    %196 = arith.truncf %188 : vector<2x32xf32> to vector<2x32xbf16>
    %c0_54 = arith.constant 0 : index
    %c0_55 = arith.constant 0 : index
    %197 = vector.load %arg11[%c0_54, %c0_55] : memref<32x128xbf16, #tpu.memory_space<vmem>>, vector<32x128xbf16>
    %cst_56 = arith.constant dense<0.000000e+00> : vector<2x128xf32>
    %198 = tpu.matmul %196, %197, %cst_56 {dimension_numbers = #tpu.dot_dimension_numbers<[1], [0], [0], [1], [0, 0, 1, 1], [], []>} : vector<2x32xbf16>, vector<32x128xbf16>, vector<2x128xf32> -> vector<2x128xf32>
    %199 = arith.addf %198, %195 : vector<2x128xf32>
    %200 = vector.extract_strided_slice %199 {offsets = [0, 0], sizes = [2, 32], strides = [1, 1]} : vector<2x128xf32> to vector<2x32xf32>
    %201 = arith.negf %200 : vector<2x32xf32>
    %202 = math.exp %201 : vector<2x32xf32>
    %cst_57 = arith.constant 1.000000e+00 : f32
    %203 = vector.broadcast %cst_57 : f32 to vector<2x32xf32>
    %204 = arith.addf %203, %202 : vector<2x32xf32>
    %205 = arith.divf %203, %204 : vector<2x32xf32>
    %206 = vector.extract_strided_slice %199 {offsets = [0, 32], sizes = [2, 32], strides = [1, 1]} : vector<2x128xf32> to vector<2x32xf32>
    %207 = arith.negf %206 : vector<2x32xf32>
    %208 = math.exp %207 : vector<2x32xf32>
    %cst_58 = arith.constant 1.000000e+00 : f32
    %209 = vector.broadcast %cst_58 : f32 to vector<2x32xf32>
    %210 = arith.addf %209, %208 : vector<2x32xf32>
    %211 = arith.divf %209, %210 : vector<2x32xf32>
    %212 = vector.extract_strided_slice %199 {offsets = [0, 64], sizes = [2, 32], strides = [1, 1]} : vector<2x128xf32> to vector<2x32xf32>
    %213 = math.tanh %212 : vector<2x32xf32>
    %214 = vector.extract_strided_slice %199 {offsets = [0, 96], sizes = [2, 32], strides = [1, 1]} : vector<2x128xf32> to vector<2x32xf32>
    %215 = arith.negf %214 : vector<2x32xf32>
    %216 = math.exp %215 : vector<2x32xf32>
    %cst_59 = arith.constant 1.000000e+00 : f32
    %217 = vector.broadcast %cst_59 : f32 to vector<2x32xf32>
    %218 = arith.addf %217, %216 : vector<2x32xf32>
    %219 = arith.divf %217, %218 : vector<2x32xf32>
    %220 = arith.mulf %211, %186 : vector<2x32xf32>
    %221 = arith.mulf %205, %213 : vector<2x32xf32>
    %222 = arith.addf %220, %221 : vector<2x32xf32>
    %223 = math.tanh %222 : vector<2x32xf32>
    %224 = arith.mulf %219, %223 : vector<2x32xf32>
    %225 = vector.extract_strided_slice %224 {offsets = [0, 0], sizes = [2, 16], strides = [1, 1]} : vector<2x32xf32> to vector<2x16xf32>
    %226 = vector.extract_strided_slice %224 {offsets = [0, 16], sizes = [2, 16], strides = [1, 1]} : vector<2x32xf32> to vector<2x16xf32>
    %227 = vector.extract_strided_slice %41 {offsets = [0, 5, 0], sizes = [2, 1, 128], strides = [1, 1, 1]} : vector<2x8x128xf32> to vector<2x1x128xf32>
    %228 = vector.shape_cast %227 : vector<2x1x128xf32> to vector<2x128xf32>
    %229 = vector.extract_strided_slice %44 {offsets = [0, 2, 0], sizes = [2, 1, 128], strides = [1, 1, 1]} : vector<2x8x128xf32> to vector<2x1x128xf32>
    %230 = vector.shape_cast %229 : vector<2x1x128xf32> to vector<2x128xf32>
    %231 = arith.addf %228, %230 : vector<2x128xf32>
    %232 = arith.truncf %224 : vector<2x32xf32> to vector<2x32xbf16>
    %c0_60 = arith.constant 0 : index
    %c0_61 = arith.constant 0 : index
    %233 = vector.load %arg11[%c0_60, %c0_61] : memref<32x128xbf16, #tpu.memory_space<vmem>>, vector<32x128xbf16>
    %cst_62 = arith.constant dense<0.000000e+00> : vector<2x128xf32>
    %234 = tpu.matmul %232, %233, %cst_62 {dimension_numbers = #tpu.dot_dimension_numbers<[1], [0], [0], [1], [0, 0, 1, 1], [], []>} : vector<2x32xbf16>, vector<32x128xbf16>, vector<2x128xf32> -> vector<2x128xf32>
    %235 = arith.addf %234, %231 : vector<2x128xf32>
    %236 = vector.extract_strided_slice %235 {offsets = [0, 0], sizes = [2, 32], strides = [1, 1]} : vector<2x128xf32> to vector<2x32xf32>
    %237 = arith.negf %236 : vector<2x32xf32>
    %238 = math.exp %237 : vector<2x32xf32>
    %cst_63 = arith.constant 1.000000e+00 : f32
    %239 = vector.broadcast %cst_63 : f32 to vector<2x32xf32>
    %240 = arith.addf %239, %238 : vector<2x32xf32>
    %241 = arith.divf %239, %240 : vector<2x32xf32>
    %242 = vector.extract_strided_slice %235 {offsets = [0, 32], sizes = [2, 32], strides = [1, 1]} : vector<2x128xf32> to vector<2x32xf32>
    %243 = arith.negf %242 : vector<2x32xf32>
    %244 = math.exp %243 : vector<2x32xf32>
    %cst_64 = arith.constant 1.000000e+00 : f32
    %245 = vector.broadcast %cst_64 : f32 to vector<2x32xf32>
    %246 = arith.addf %245, %244 : vector<2x32xf32>
    %247 = arith.divf %245, %246 : vector<2x32xf32>
    %248 = vector.extract_strided_slice %235 {offsets = [0, 64], sizes = [2, 32], strides = [1, 1]} : vector<2x128xf32> to vector<2x32xf32>
    %249 = math.tanh %248 : vector<2x32xf32>
    %250 = vector.extract_strided_slice %235 {offsets = [0, 96], sizes = [2, 32], strides = [1, 1]} : vector<2x128xf32> to vector<2x32xf32>
    %251 = arith.negf %250 : vector<2x32xf32>
    %252 = math.exp %251 : vector<2x32xf32>
    %cst_65 = arith.constant 1.000000e+00 : f32
    %253 = vector.broadcast %cst_65 : f32 to vector<2x32xf32>
    %254 = arith.addf %253, %252 : vector<2x32xf32>
    %255 = arith.divf %253, %254 : vector<2x32xf32>
    %256 = arith.mulf %247, %222 : vector<2x32xf32>
    %257 = arith.mulf %241, %249 : vector<2x32xf32>
    %258 = arith.addf %256, %257 : vector<2x32xf32>
    %259 = math.tanh %258 : vector<2x32xf32>
    %260 = arith.mulf %255, %259 : vector<2x32xf32>
    %261 = vector.extract_strided_slice %260 {offsets = [0, 0], sizes = [2, 16], strides = [1, 1]} : vector<2x32xf32> to vector<2x16xf32>
    %262 = vector.extract_strided_slice %260 {offsets = [0, 16], sizes = [2, 16], strides = [1, 1]} : vector<2x32xf32> to vector<2x16xf32>
    %263 = vector.extract_strided_slice %41 {offsets = [0, 6, 0], sizes = [2, 1, 128], strides = [1, 1, 1]} : vector<2x8x128xf32> to vector<2x1x128xf32>
    %264 = vector.shape_cast %263 : vector<2x1x128xf32> to vector<2x128xf32>
    %265 = vector.extract_strided_slice %44 {offsets = [0, 1, 0], sizes = [2, 1, 128], strides = [1, 1, 1]} : vector<2x8x128xf32> to vector<2x1x128xf32>
    %266 = vector.shape_cast %265 : vector<2x1x128xf32> to vector<2x128xf32>
    %267 = arith.addf %264, %266 : vector<2x128xf32>
    %268 = arith.truncf %260 : vector<2x32xf32> to vector<2x32xbf16>
    %c0_66 = arith.constant 0 : index
    %c0_67 = arith.constant 0 : index
    %269 = vector.load %arg11[%c0_66, %c0_67] : memref<32x128xbf16, #tpu.memory_space<vmem>>, vector<32x128xbf16>
    %cst_68 = arith.constant dense<0.000000e+00> : vector<2x128xf32>
    %270 = tpu.matmul %268, %269, %cst_68 {dimension_numbers = #tpu.dot_dimension_numbers<[1], [0], [0], [1], [0, 0, 1, 1], [], []>} : vector<2x32xbf16>, vector<32x128xbf16>, vector<2x128xf32> -> vector<2x128xf32>
    %271 = arith.addf %270, %267 : vector<2x128xf32>
    %272 = vector.extract_strided_slice %271 {offsets = [0, 0], sizes = [2, 32], strides = [1, 1]} : vector<2x128xf32> to vector<2x32xf32>
    %273 = arith.negf %272 : vector<2x32xf32>
    %274 = math.exp %273 : vector<2x32xf32>
    %cst_69 = arith.constant 1.000000e+00 : f32
    %275 = vector.broadcast %cst_69 : f32 to vector<2x32xf32>
    %276 = arith.addf %275, %274 : vector<2x32xf32>
    %277 = arith.divf %275, %276 : vector<2x32xf32>
    %278 = vector.extract_strided_slice %271 {offsets = [0, 32], sizes = [2, 32], strides = [1, 1]} : vector<2x128xf32> to vector<2x32xf32>
    %279 = arith.negf %278 : vector<2x32xf32>
    %280 = math.exp %279 : vector<2x32xf32>
    %cst_70 = arith.constant 1.000000e+00 : f32
    %281 = vector.broadcast %cst_70 : f32 to vector<2x32xf32>
    %282 = arith.addf %281, %280 : vector<2x32xf32>
    %283 = arith.divf %281, %282 : vector<2x32xf32>
    %284 = vector.extract_strided_slice %271 {offsets = [0, 64], sizes = [2, 32], strides = [1, 1]} : vector<2x128xf32> to vector<2x32xf32>
    %285 = math.tanh %284 : vector<2x32xf32>
    %286 = vector.extract_strided_slice %271 {offsets = [0, 96], sizes = [2, 32], strides = [1, 1]} : vector<2x128xf32> to vector<2x32xf32>
    %287 = arith.negf %286 : vector<2x32xf32>
    %288 = math.exp %287 : vector<2x32xf32>
    %cst_71 = arith.constant 1.000000e+00 : f32
    %289 = vector.broadcast %cst_71 : f32 to vector<2x32xf32>
    %290 = arith.addf %289, %288 : vector<2x32xf32>
    %291 = arith.divf %289, %290 : vector<2x32xf32>
    %292 = arith.mulf %283, %258 : vector<2x32xf32>
    %293 = arith.mulf %277, %285 : vector<2x32xf32>
    %294 = arith.addf %292, %293 : vector<2x32xf32>
    %295 = math.tanh %294 : vector<2x32xf32>
    %296 = arith.mulf %291, %295 : vector<2x32xf32>
    %297 = vector.extract_strided_slice %296 {offsets = [0, 0], sizes = [2, 16], strides = [1, 1]} : vector<2x32xf32> to vector<2x16xf32>
    %298 = vector.extract_strided_slice %296 {offsets = [0, 16], sizes = [2, 16], strides = [1, 1]} : vector<2x32xf32> to vector<2x16xf32>
    %299 = vector.extract_strided_slice %41 {offsets = [0, 7, 0], sizes = [2, 1, 128], strides = [1, 1, 1]} : vector<2x8x128xf32> to vector<2x1x128xf32>
    %300 = vector.shape_cast %299 : vector<2x1x128xf32> to vector<2x128xf32>
    %301 = vector.extract_strided_slice %44 {offsets = [0, 0, 0], sizes = [2, 1, 128], strides = [1, 1, 1]} : vector<2x8x128xf32> to vector<2x1x128xf32>
    %302 = vector.shape_cast %301 : vector<2x1x128xf32> to vector<2x128xf32>
    %303 = arith.addf %300, %302 : vector<2x128xf32>
    %304 = arith.truncf %296 : vector<2x32xf32> to vector<2x32xbf16>
    %c0_72 = arith.constant 0 : index
    %c0_73 = arith.constant 0 : index
    %305 = vector.load %arg11[%c0_72, %c0_73] : memref<32x128xbf16, #tpu.memory_space<vmem>>, vector<32x128xbf16>
    %cst_74 = arith.constant dense<0.000000e+00> : vector<2x128xf32>
    %306 = tpu.matmul %304, %305, %cst_74 {dimension_numbers = #tpu.dot_dimension_numbers<[1], [0], [0], [1], [0, 0, 1, 1], [], []>} : vector<2x32xbf16>, vector<32x128xbf16>, vector<2x128xf32> -> vector<2x128xf32>
    %307 = arith.addf %306, %303 : vector<2x128xf32>
    %308 = vector.extract_strided_slice %307 {offsets = [0, 0], sizes = [2, 32], strides = [1, 1]} : vector<2x128xf32> to vector<2x32xf32>
    %309 = arith.negf %308 : vector<2x32xf32>
    %310 = math.exp %309 : vector<2x32xf32>
    %cst_75 = arith.constant 1.000000e+00 : f32
    %311 = vector.broadcast %cst_75 : f32 to vector<2x32xf32>
    %312 = arith.addf %311, %310 : vector<2x32xf32>
    %313 = arith.divf %311, %312 : vector<2x32xf32>
    %314 = vector.extract_strided_slice %307 {offsets = [0, 32], sizes = [2, 32], strides = [1, 1]} : vector<2x128xf32> to vector<2x32xf32>
    %315 = arith.negf %314 : vector<2x32xf32>
    %316 = math.exp %315 : vector<2x32xf32>
    %cst_76 = arith.constant 1.000000e+00 : f32
    %317 = vector.broadcast %cst_76 : f32 to vector<2x32xf32>
    %318 = arith.addf %317, %316 : vector<2x32xf32>
    %319 = arith.divf %317, %318 : vector<2x32xf32>
    %320 = vector.extract_strided_slice %307 {offsets = [0, 64], sizes = [2, 32], strides = [1, 1]} : vector<2x128xf32> to vector<2x32xf32>
    %321 = math.tanh %320 : vector<2x32xf32>
    %322 = vector.extract_strided_slice %307 {offsets = [0, 96], sizes = [2, 32], strides = [1, 1]} : vector<2x128xf32> to vector<2x32xf32>
    %323 = arith.negf %322 : vector<2x32xf32>
    %324 = math.exp %323 : vector<2x32xf32>
    %cst_77 = arith.constant 1.000000e+00 : f32
    %325 = vector.broadcast %cst_77 : f32 to vector<2x32xf32>
    %326 = arith.addf %325, %324 : vector<2x32xf32>
    %327 = arith.divf %325, %326 : vector<2x32xf32>
    %328 = arith.mulf %319, %294 : vector<2x32xf32>
    %329 = arith.mulf %313, %321 : vector<2x32xf32>
    %330 = arith.addf %328, %329 : vector<2x32xf32>
    %331 = math.tanh %330 : vector<2x32xf32>
    %332 = arith.mulf %327, %331 : vector<2x32xf32>
    %333 = vector.extract_strided_slice %332 {offsets = [0, 0], sizes = [2, 16], strides = [1, 1]} : vector<2x32xf32> to vector<2x16xf32>
    %334 = vector.extract_strided_slice %332 {offsets = [0, 16], sizes = [2, 16], strides = [1, 1]} : vector<2x32xf32> to vector<2x16xf32>
    %335 = vector.shape_cast %81 : vector<2x16xf32> to vector<2x1x16xf32>
    %336 = vector.shape_cast %117 : vector<2x16xf32> to vector<2x1x16xf32>
    %337 = vector.shape_cast %153 : vector<2x16xf32> to vector<2x1x16xf32>
    %338 = vector.shape_cast %189 : vector<2x16xf32> to vector<2x1x16xf32>
    %339 = vector.shape_cast %225 : vector<2x16xf32> to vector<2x1x16xf32>
    %340 = vector.shape_cast %261 : vector<2x16xf32> to vector<2x1x16xf32>
    %341 = vector.shape_cast %297 : vector<2x16xf32> to vector<2x1x16xf32>
    %342 = vector.shape_cast %333 : vector<2x16xf32> to vector<2x1x16xf32>
    %343 = tpu.concatenate %335, %336, %337, %338, %339, %340, %341, %342 in 1 : vector<2x1x16xf32>, vector<2x1x16xf32>, vector<2x1x16xf32>, vector<2x1x16xf32>, vector<2x1x16xf32>, vector<2x1x16xf32>, vector<2x1x16xf32>, vector<2x1x16xf32> -> vector<2x8x16xf32>
    %344 = vector.shape_cast %334 : vector<2x16xf32> to vector<2x1x16xf32>
    %345 = vector.shape_cast %298 : vector<2x16xf32> to vector<2x1x16xf32>
    %346 = vector.shape_cast %262 : vector<2x16xf32> to vector<2x1x16xf32>
    %347 = vector.shape_cast %226 : vector<2x16xf32> to vector<2x1x16xf32>
    %348 = vector.shape_cast %190 : vector<2x16xf32> to vector<2x1x16xf32>
    %349 = vector.shape_cast %154 : vector<2x16xf32> to vector<2x1x16xf32>
    %350 = vector.shape_cast %118 : vector<2x16xf32> to vector<2x1x16xf32>
    %351 = vector.shape_cast %82 : vector<2x16xf32> to vector<2x1x16xf32>
    %352 = tpu.concatenate %344, %345, %346, %347, %348, %349, %350, %351 in 1 : vector<2x1x16xf32>, vector<2x1x16xf32>, vector<2x1x16xf32>, vector<2x1x16xf32>, vector<2x1x16xf32>, vector<2x1x16xf32>, vector<2x1x16xf32>, vector<2x1x16xf32> -> vector<2x8x16xf32>
    %353 = tpu.concatenate %343, %352 in 2 : vector<2x8x16xf32>, vector<2x8x16xf32> -> vector<2x8x32xf32>
    %354 = vector.shape_cast %353 : vector<2x8x32xf32> to vector<16x32xf32>
    %355 = arith.truncf %354 : vector<16x32xf32> to vector<16x32xbf16>
    %c0_78 = arith.constant 0 : index
    %c0_79 = arith.constant 0 : index
    %356 = vector.load %arg12[%c0_78, %c0_79] : memref<32x16xbf16, #tpu.memory_space<vmem>>, vector<32x16xbf16>
    %cst_80 = arith.constant dense<0.000000e+00> : vector<16x16xf32>
    %357 = tpu.matmul %355, %356, %cst_80 {dimension_numbers = #tpu.dot_dimension_numbers<[1], [0], [0], [1], [0, 0, 1, 1], [], []>} : vector<16x32xbf16>, vector<32x16xbf16>, vector<16x16xf32> -> vector<16x16xf32>
    %c0_81 = arith.constant 0 : index
    %c0_82 = arith.constant 0 : index
    %358 = vector.load %arg13[%c0_81, %c0_82] : memref<1x16xf32, #tpu.memory_space<vmem>>, vector<1x16xf32>
    %359 = vector.broadcast %358 : vector<1x16xf32> to vector<16x16xf32>
    %360 = arith.addf %357, %359 : vector<16x16xf32>
    %cst_83 = arith.constant 0.000000e+00 : f32
    %361 = vector.broadcast %cst_83 : f32 to vector<16x16xf32>
    %362 = arith.maximumf %360, %361 : vector<16x16xf32>
    %363 = arith.truncf %362 : vector<16x16xf32> to vector<16x16xbf16>
    %c0_84 = arith.constant 0 : index
    %c0_85 = arith.constant 0 : index
    %364 = vector.load %arg14[%c0_84, %c0_85] : memref<16x16xbf16, #tpu.memory_space<vmem>>, vector<16x16xbf16>
    %cst_86 = arith.constant dense<0.000000e+00> : vector<16x16xf32>
    %365 = tpu.matmul %363, %364, %cst_86 {dimension_numbers = #tpu.dot_dimension_numbers<[1], [0], [0], [1], [0, 0, 1, 1], [], []>} : vector<16x16xbf16>, vector<16x16xbf16>, vector<16x16xf32> -> vector<16x16xf32>
    %c0_87 = arith.constant 0 : index
    %c0_88 = arith.constant 0 : index
    %366 = vector.load %arg15[%c0_87, %c0_88] : memref<1x16xf32, #tpu.memory_space<vmem>>, vector<1x16xf32>
    %367 = vector.broadcast %366 : vector<1x16xf32> to vector<16x16xf32>
    %368 = arith.addf %365, %367 : vector<16x16xf32>
    %cst_89 = arith.constant 0.000000e+00 : f32
    %369 = vector.broadcast %cst_89 : f32 to vector<16x16xf32>
    %370 = arith.maximumf %368, %369 : vector<16x16xf32>
    %371 = arith.truncf %370 : vector<16x16xf32> to vector<16x16xbf16>
    %c0_90 = arith.constant 0 : index
    %c0_91 = arith.constant 0 : index
    %372 = vector.load %arg16[%c0_90, %c0_91] : memref<16x1xbf16, #tpu.memory_space<vmem>>, vector<16x1xbf16>
    %cst_92 = arith.constant dense<0.000000e+00> : vector<16x1xf32>
    %373 = tpu.matmul %371, %372, %cst_92 {dimension_numbers = #tpu.dot_dimension_numbers<[1], [0], [0], [1], [0, 0, 1, 1], [], []>} : vector<16x16xbf16>, vector<16x1xbf16>, vector<16x1xf32> -> vector<16x1xf32>
    %c0_93 = arith.constant 0 : index
    %c0_94 = arith.constant 0 : index
    %374 = vector.load %arg17[%c0_93, %c0_94] : memref<1x1xf32, #tpu.memory_space<vmem>>, vector<1x1xf32>
    %375 = vector.broadcast %374 : vector<1x1xf32> to vector<16x1xf32>
    %376 = arith.addf %373, %375 : vector<16x1xf32>
    %377 = arith.negf %376 : vector<16x1xf32>
    %378 = math.exp %377 : vector<16x1xf32>
    %cst_95 = arith.constant 1.000000e+00 : f32
    %379 = vector.broadcast %cst_95 : f32 to vector<16x1xf32>
    %380 = arith.addf %379, %378 : vector<16x1xf32>
    %381 = arith.divf %379, %380 : vector<16x1xf32>
    %382 = tpu.iota {dimensions = array<i32: 0>} : vector<16x16xi32>
    %c8_i32 = arith.constant 8 : i32
    %c0_i32 = arith.constant 0 : i32
    %383 = arith.cmpi eq, %c8_i32, %c0_i32 : i32
    %c1_i32 = arith.constant 1 : i32
    %384 = arith.select %383, %c1_i32, %c8_i32 : i32
    %385 = vector.broadcast %384 : i32 to vector<16x16xi32>
    %386 = arith.remsi %382, %385 : vector<16x16xi32>
    %c0_i32_96 = arith.constant 0 : i32
    %387 = vector.broadcast %c0_i32_96 : i32 to vector<16x16xi32>
    %388 = arith.cmpi ne, %386, %387 : vector<16x16xi32>
    %c0_i32_97 = arith.constant 0 : i32
    %389 = vector.broadcast %c0_i32_97 : i32 to vector<16x16xi32>
    %390 = arith.cmpi slt, %386, %389 : vector<16x16xi32>
    %c0_i32_98 = arith.constant 0 : i32
    %391 = arith.cmpi slt, %384, %c0_i32_98 : i32
    %392 = vector.broadcast %391 : i1 to vector<16x16xi1>
    %393 = vector.broadcast %392 : vector<16x16xi1> to vector<16x16xi1>
    %394 = arith.xori %390, %393 : vector<16x16xi1>
    %395 = arith.andi %394, %388 : vector<16x16xi1>
    %396 = vector.broadcast %384 : i32 to vector<16x16xi32>
    %397 = arith.addi %386, %396 : vector<16x16xi32>
    %398 = arith.select %395, %397, %386 : vector<16x16xi1>, vector<16x16xi32>
    %c-1_i32 = arith.constant -1 : i32
    %399 = vector.broadcast %c-1_i32 : i32 to vector<16x16xi32>
    %400 = arith.addi %398, %399 : vector<16x16xi32>
    %c0_i32_99 = arith.constant 0 : i32
    %401 = vector.broadcast %c0_i32_99 : i32 to vector<16x16xi32>
    %402 = arith.cmpi sge, %400, %401 : vector<16x16xi32>
    %c-1_i32_100 = arith.constant -1 : i32
    %403 = vector.broadcast %c-1_i32_100 : i32 to vector<16x16xi32>
    %404 = arith.addi %398, %403 : vector<16x16xi32>
    %c8_i32_101 = arith.constant 8 : i32
    %405 = vector.broadcast %c8_i32_101 : i32 to vector<16x16xi32>
    %406 = arith.cmpi slt, %404, %405 : vector<16x16xi32>
    %407 = arith.andi %402, %406 : vector<16x16xi1>
    %c1_i32_102 = arith.constant 1 : i32
    %408 = vector.broadcast %c1_i32_102 : i32 to vector<16x16xi32>
    %409 = arith.addi %398, %408 : vector<16x16xi32>
    %c0_i32_103 = arith.constant 0 : i32
    %410 = vector.broadcast %c0_i32_103 : i32 to vector<16x16xi32>
    %411 = arith.cmpi sge, %409, %410 : vector<16x16xi32>
    %c1_i32_104 = arith.constant 1 : i32
    %412 = vector.broadcast %c1_i32_104 : i32 to vector<16x16xi32>
    %413 = arith.addi %398, %412 : vector<16x16xi32>
    %c8_i32_105 = arith.constant 8 : i32
    %414 = vector.broadcast %c8_i32_105 : i32 to vector<16x16xi32>
    %415 = arith.cmpi slt, %413, %414 : vector<16x16xi32>
    %416 = arith.andi %411, %415 : vector<16x16xi1>
    %417 = vector.broadcast %381 : vector<16x1xf32> to vector<16x16xf32>
    %418 = arith.mulf %11, %417 : vector<16x16xf32>
    %419 = vector.extract_strided_slice %418 {offsets = [15, 0], sizes = [1, 16], strides = [1, 1]} : vector<16x16xf32> to vector<1x16xf32>
    %420 = vector.extract_strided_slice %418 {offsets = [0, 0], sizes = [15, 16], strides = [1, 1]} : vector<16x16xf32> to vector<15x16xf32>
    %421 = tpu.concatenate %419, %420 in 0 : vector<1x16xf32>, vector<15x16xf32> -> vector<16x16xf32>
    %cst_106 = arith.constant 0.000000e+00 : f32
    %422 = vector.broadcast %cst_106 : f32 to vector<16x16xf32>
    %423 = arith.select %407, %421, %422 : vector<16x16xi1>, vector<16x16xf32>
    %424 = vector.extract_strided_slice %418 {offsets = [1, 0], sizes = [15, 16], strides = [1, 1]} : vector<16x16xf32> to vector<15x16xf32>
    %425 = vector.extract_strided_slice %418 {offsets = [0, 0], sizes = [1, 16], strides = [1, 1]} : vector<16x16xf32> to vector<1x16xf32>
    %426 = tpu.concatenate %424, %425 in 0 : vector<15x16xf32>, vector<1x16xf32> -> vector<16x16xf32>
    %cst_107 = arith.constant 0.000000e+00 : f32
    %427 = vector.broadcast %cst_107 : f32 to vector<16x16xf32>
    %428 = arith.select %416, %426, %427 : vector<16x16xi1>, vector<16x16xf32>
    %429 = tpu.concatenate %423, %418, %428 in 1 : vector<16x16xf32>, vector<16x16xf32>, vector<16x16xf32> -> vector<16x48xf32>
    %430 = arith.truncf %429 : vector<16x48xf32> to vector<16x48xbf16>
    %c0_108 = arith.constant 0 : index
    %c0_109 = arith.constant 0 : index
    %431 = vector.load %arg18[%c0_108, %c0_109] : memref<48x16xbf16, #tpu.memory_space<vmem>>, vector<48x16xbf16>
    %cst_110 = arith.constant dense<0.000000e+00> : vector<16x16xf32>
    %432 = tpu.matmul %430, %431, %cst_110 {dimension_numbers = #tpu.dot_dimension_numbers<[1], [0], [0], [1], [0, 0, 1, 1], [], []>} : vector<16x48xbf16>, vector<48x16xbf16>, vector<16x16xf32> -> vector<16x16xf32>
    %c0_111 = arith.constant 0 : index
    %c0_112 = arith.constant 0 : index
    %433 = vector.load %arg19[%c0_111, %c0_112] : memref<1x16xf32, #tpu.memory_space<vmem>>, vector<1x16xf32>
    %434 = vector.broadcast %433 : vector<1x16xf32> to vector<16x16xf32>
    %435 = arith.addf %432, %434 : vector<16x16xf32>
    %cst_113 = arith.constant 0.000000e+00 : f32
    %436 = vector.broadcast %cst_113 : f32 to vector<16x16xf32>
    %437 = arith.maximumf %435, %436 : vector<16x16xf32>
    %438 = vector.shape_cast %437 : vector<16x16xf32> to vector<2x8x16xf32>
    %cst_114 = arith.constant dense<0xFF800000> : vector<2x16xf32>
    %439 = vector.multi_reduction <maximumf>, %438, %cst_114 [1] : vector<2x8x16xf32> to vector<2x16xf32>
    %440 = arith.truncf %439 : vector<2x16xf32> to vector<2x16xbf16>
    %c0_115 = arith.constant 0 : index
    %c0_116 = arith.constant 0 : index
    %441 = vector.load %arg20[%c0_115, %c0_116] : memref<16x4xbf16, #tpu.memory_space<vmem>>, vector<16x4xbf16>
    %cst_117 = arith.constant dense<0.000000e+00> : vector<2x4xf32>
    %442 = tpu.matmul %440, %441, %cst_117 {dimension_numbers = #tpu.dot_dimension_numbers<[1], [0], [0], [1], [0, 0, 1, 1], [], []>} : vector<2x16xbf16>, vector<16x4xbf16>, vector<2x4xf32> -> vector<2x4xf32>
    %c0_118 = arith.constant 0 : index
    %c0_119 = arith.constant 0 : index
    %443 = vector.load %arg21[%c0_118, %c0_119] : memref<1x4xf32, #tpu.memory_space<vmem>>, vector<1x4xf32>
    %444 = vector.broadcast %443 : vector<1x4xf32> to vector<2x4xf32>
    %445 = arith.addf %442, %444 : vector<2x4xf32>
    %cst_120 = arith.constant dense<0xFF800000> : vector<2xf32>
    %446 = vector.multi_reduction <maximumf>, %445, %cst_120 [1] : vector<2x4xf32> to vector<2xf32>
    %447 = vector.shape_cast %446 : vector<2xf32> to vector<2x1xf32>
    %448 = vector.broadcast %447 : vector<2x1xf32> to vector<2x4xf32>
    %449 = arith.subf %445, %448 : vector<2x4xf32>
    %450 = math.exp %449 : vector<2x4xf32>
    %cst_121 = arith.constant dense<0.000000e+00> : vector<2xf32>
    %451 = vector.multi_reduction <add>, %450, %cst_121 [1] : vector<2x4xf32> to vector<2xf32>
    %452 = vector.shape_cast %451 : vector<2xf32> to vector<2x1xf32>
    %453 = vector.broadcast %452 : vector<2x1xf32> to vector<2x4xf32>
    %454 = arith.divf %450, %453 : vector<2x4xf32>
    %455 = vector.broadcast %381 : vector<16x1xf32> to vector<16x16xf32>
    %456 = arith.mulf %12, %455 : vector<16x16xf32>
    %457 = vector.extract_strided_slice %456 {offsets = [15, 0], sizes = [1, 16], strides = [1, 1]} : vector<16x16xf32> to vector<1x16xf32>
    %458 = vector.extract_strided_slice %456 {offsets = [0, 0], sizes = [15, 16], strides = [1, 1]} : vector<16x16xf32> to vector<15x16xf32>
    %459 = tpu.concatenate %457, %458 in 0 : vector<1x16xf32>, vector<15x16xf32> -> vector<16x16xf32>
    %cst_122 = arith.constant 0.000000e+00 : f32
    %460 = vector.broadcast %cst_122 : f32 to vector<16x16xf32>
    %461 = arith.select %407, %459, %460 : vector<16x16xi1>, vector<16x16xf32>
    %462 = vector.extract_strided_slice %456 {offsets = [1, 0], sizes = [15, 16], strides = [1, 1]} : vector<16x16xf32> to vector<15x16xf32>
    %463 = vector.extract_strided_slice %456 {offsets = [0, 0], sizes = [1, 16], strides = [1, 1]} : vector<16x16xf32> to vector<1x16xf32>
    %464 = tpu.concatenate %462, %463 in 0 : vector<15x16xf32>, vector<1x16xf32> -> vector<16x16xf32>
    %cst_123 = arith.constant 0.000000e+00 : f32
    %465 = vector.broadcast %cst_123 : f32 to vector<16x16xf32>
    %466 = arith.select %416, %464, %465 : vector<16x16xi1>, vector<16x16xf32>
    %467 = tpu.concatenate %461, %456, %466 in 1 : vector<16x16xf32>, vector<16x16xf32>, vector<16x16xf32> -> vector<16x48xf32>
    %468 = arith.truncf %467 : vector<16x48xf32> to vector<16x48xbf16>
    %c0_124 = arith.constant 0 : index
    %c0_125 = arith.constant 0 : index
    %469 = vector.load %arg22[%c0_124, %c0_125] : memref<48x16xbf16, #tpu.memory_space<vmem>>, vector<48x16xbf16>
    %cst_126 = arith.constant dense<0.000000e+00> : vector<16x16xf32>
    %470 = tpu.matmul %468, %469, %cst_126 {dimension_numbers = #tpu.dot_dimension_numbers<[1], [0], [0], [1], [0, 0, 1, 1], [], []>} : vector<16x48xbf16>, vector<48x16xbf16>, vector<16x16xf32> -> vector<16x16xf32>
    %c0_127 = arith.constant 0 : index
    %c0_128 = arith.constant 0 : index
    %471 = vector.load %arg23[%c0_127, %c0_128] : memref<1x16xf32, #tpu.memory_space<vmem>>, vector<1x16xf32>
    %472 = vector.broadcast %471 : vector<1x16xf32> to vector<16x16xf32>
    %473 = arith.addf %470, %472 : vector<16x16xf32>
    %cst_129 = arith.constant 0.000000e+00 : f32
    %474 = vector.broadcast %cst_129 : f32 to vector<16x16xf32>
    %475 = arith.maximumf %473, %474 : vector<16x16xf32>
    %476 = vector.shape_cast %475 : vector<16x16xf32> to vector<2x8x16xf32>
    %cst_130 = arith.constant dense<0xFF800000> : vector<2x16xf32>
    %477 = vector.multi_reduction <maximumf>, %476, %cst_130 [1] : vector<2x8x16xf32> to vector<2x16xf32>
    %478 = arith.truncf %477 : vector<2x16xf32> to vector<2x16xbf16>
    %c0_131 = arith.constant 0 : index
    %c0_132 = arith.constant 0 : index
    %479 = vector.load %arg24[%c0_131, %c0_132] : memref<16x4xbf16, #tpu.memory_space<vmem>>, vector<16x4xbf16>
    %cst_133 = arith.constant dense<0.000000e+00> : vector<2x4xf32>
    %480 = tpu.matmul %478, %479, %cst_133 {dimension_numbers = #tpu.dot_dimension_numbers<[1], [0], [0], [1], [0, 0, 1, 1], [], []>} : vector<2x16xbf16>, vector<16x4xbf16>, vector<2x4xf32> -> vector<2x4xf32>
    %c0_134 = arith.constant 0 : index
    %c0_135 = arith.constant 0 : index
    %481 = vector.load %arg25[%c0_134, %c0_135] : memref<1x4xf32, #tpu.memory_space<vmem>>, vector<1x4xf32>
    %482 = vector.broadcast %481 : vector<1x4xf32> to vector<2x4xf32>
    %483 = arith.addf %480, %482 : vector<2x4xf32>
    %cst_136 = arith.constant dense<0xFF800000> : vector<2xf32>
    %484 = vector.multi_reduction <maximumf>, %483, %cst_136 [1] : vector<2x4xf32> to vector<2xf32>
    %485 = vector.shape_cast %484 : vector<2xf32> to vector<2x1xf32>
    %486 = vector.broadcast %485 : vector<2x1xf32> to vector<2x4xf32>
    %487 = arith.subf %483, %486 : vector<2x4xf32>
    %488 = math.exp %487 : vector<2x4xf32>
    %cst_137 = arith.constant dense<0.000000e+00> : vector<2xf32>
    %489 = vector.multi_reduction <add>, %488, %cst_137 [1] : vector<2x4xf32> to vector<2xf32>
    %490 = vector.shape_cast %489 : vector<2xf32> to vector<2x1xf32>
    %491 = vector.broadcast %490 : vector<2x1xf32> to vector<2x4xf32>
    %492 = arith.divf %488, %491 : vector<2x4xf32>
    %493 = vector.broadcast %381 : vector<16x1xf32> to vector<16x4xf32>
    %494 = arith.mulf %34, %493 : vector<16x4xf32>
    %495 = vector.shape_cast %494 : vector<16x4xf32> to vector<2x8x4xf32>
    %cst_138 = arith.constant dense<0.000000e+00> : vector<2x4xf32>
    %496 = vector.multi_reduction <add>, %495, %cst_138 [1] : vector<2x8x4xf32> to vector<2x4xf32>
    %cst_139 = arith.constant dense<0xFF800000> : vector<2xf32>
    %497 = vector.multi_reduction <maximumf>, %496, %cst_139 [1] : vector<2x4xf32> to vector<2xf32>
    %498 = vector.shape_cast %497 : vector<2xf32> to vector<2x1xf32>
    %499 = vector.broadcast %498 : vector<2x1xf32> to vector<2x4xf32>
    %500 = arith.subf %496, %499 : vector<2x4xf32>
    %501 = math.exp %500 : vector<2x4xf32>
    %cst_140 = arith.constant dense<0.000000e+00> : vector<2xf32>
    %502 = vector.multi_reduction <add>, %501, %cst_140 [1] : vector<2x4xf32> to vector<2xf32>
    %503 = vector.shape_cast %502 : vector<2xf32> to vector<2x1xf32>
    %504 = vector.broadcast %503 : vector<2x1xf32> to vector<2x4xf32>
    %505 = arith.divf %501, %504 : vector<2x4xf32>
    %506 = vector.shape_cast %505 : vector<2x4xf32> to vector<2x1x4xf32>
    %507 = vector.shape_cast %454 : vector<2x4xf32> to vector<2x1x4xf32>
    %508 = vector.shape_cast %492 : vector<2x4xf32> to vector<2x1x4xf32>
    %509 = vector.shape_cast %34 : vector<16x4xf32> to vector<2x8x4xf32>
    %510 = tpu.concatenate %506, %507, %508, %509 in 1 : vector<2x1x4xf32>, vector<2x1x4xf32>, vector<2x1x4xf32>, vector<2x8x4xf32> -> vector<2x11x4xf32>
    %c0_141 = arith.constant 0 : index
    %c0_142 = arith.constant 0 : index
    %c0_143 = arith.constant 0 : index
    %511 = vector.load %arg26[%c0_141, %c0_142, %c0_143] : memref<2x11x4xf32, #tpu.memory_space<vmem>>, vector<2x11x4xf32>
    tpu.vector_store %arg26[%c0_141, %c0_142, %c0_143], %510 {strides = array<i32>} : memref<2x11x4xf32, #tpu.memory_space<vmem>>, vector<2x11x4xf32>,
    return
  }
}

</mosaic_0001>

<llo_original>
// kernel: model_forward.1
$region0: #{model_forward.1}
  #allocation0 [shape = 'u32[]', space=smem, size = 0x4, offset = 0x4, fixed_abs, tag = 'smem constant byte address 0x4 - core index']
  #allocation1 [shape = 'u32[144,128]{1,0:T(1,128)}', space=vmem, size = 0x12000, scoped, tag = 'internal scratch']
  #allocation2 [shape = 'f32[1,1]{1,0:T(1,128)S(1)}', space=vmem, size = 0x200, scoped, tag = 'scoped memory for model_forward.1']
  %s0 = inlined_call_operand.vmem [shape: s32[16,1], index: 0, kind: input, shape index: {}]
  %s1 = inlined_call_operand.vmem [shape: bf16[32,64], index: 1, kind: input, shape index: {}]
  %s2 = inlined_call_operand.vmem [shape: bf16[16,16], index: 2, kind: input, shape index: {}]
  %s3 = inlined_call_operand.vmem [shape: f32[1,16], index: 3, kind: input, shape index: {}]
  %s4 = inlined_call_operand.vmem [shape: bf16[16,16], index: 4, kind: input, shape index: {}]
  %s5 = inlined_call_operand.vmem [shape: f32[1,16], index: 5, kind: input, shape index: {}]
  %s6 = inlined_call_operand.vmem [shape: bf16[16,4], index: 6, kind: input, shape index: {}]
  %s7 = inlined_call_operand.vmem [shape: f32[1,4], index: 7, kind: input, shape index: {}]
  %s8 = inlined_call_operand.vmem [shape: bf16[16,128], index: 8, kind: input, shape index: {}]
  %s9 = inlined_call_operand.vmem [shape: bf16[16,128], index: 9, kind: input, shape index: {}]
  %s10 = inlined_call_operand.vmem [shape: f32[1,128], index: 10, kind: input, shape index: {}]
  %s11 = inlined_call_operand.vmem [shape: bf16[32,128], index: 11, kind: input, shape index: {}]
  %s12 = inlined_call_operand.vmem [shape: bf16[32,16], index: 12, kind: input, shape index: {}]
  %s13 = inlined_call_operand.vmem [shape: f32[1,16], index: 13, kind: input, shape index: {}]
  %s14 = inlined_call_operand.vmem [shape: bf16[16,16], index: 14, kind: input, shape index: {}]
  %s15 = inlined_call_operand.vmem [shape: f32[1,16], index: 15, kind: input, shape index: {}]
  %s16 = inlined_call_operand.vmem [shape: bf16[16,1], index: 16, kind: input, shape index: {}]
  %s17 = inlined_call_operand.<no memory space> [shape: f32[1,1], index: 17, kind: input, shape index: {}]
  %s18 = inlined_call_operand.vmem [shape: bf16[48,16], index: 18, kind: input, shape index: {}]
  %s19 = inlined_call_operand.vmem [shape: f32[1,16], index: 19, kind: input, shape index: {}]
  %s20 = inlined_call_operand.vmem [shape: bf16[16,4], index: 20, kind: input, shape index: {}]
  %s21 = inlined_call_operand.vmem [shape: f32[1,4], index: 21, kind: input, shape index: {}]
  %s22 = inlined_call_operand.vmem [shape: bf16[48,16], index: 22, kind: input, shape index: {}]
  %s23 = inlined_call_operand.vmem [shape: f32[1,16], index: 23, kind: input, shape index: {}]
  %s24 = inlined_call_operand.vmem [shape: bf16[16,4], index: 24, kind: input, shape index: {}]
  %s25 = inlined_call_operand.vmem [shape: f32[1,4], index: 25, kind: input, shape index: {}]
  %s26 = inlined_call_operand.vmem [shape: f32[2,11,4], index: 26, kind: output, shape index: {}]
  %s27 = sld [smem:[#allocation0]]
  $region114: #{model_forward.1} parent=0
    _
  %s29 = ssub.s32 1, %s27
  %s30 = scalar_select 0, %s29, %s27
  %v31 = vstv %s17
  %32 = vst [vmem:[#allocation2] sm:$0x1] %v31
  // Predicated region
  $region2: #{model_forward.1} parent=0 // pred_check
    _
  $region3: #{model_forward.1} parent=0 // pred_check_branch
    %34 = sbr.rel (0) target = $region5
  $region4: #{model_forward.1} parent=0 // pred_region
    _
  $region5: #{model_forward.1} parent=0 // pred_fallthru
    _
  // Predicated region
  $region6: #{model_forward.1} parent=0 // pred_check
    _
  $region7: #{model_forward.1} parent=0 // pred_check_branch
    %36 = sbr.rel (0) target = $region9
  $region8: #{model_forward.1} parent=0 // pred_region
    _
  $region9: #{model_forward.1} parent=0 // pred_fallthru
    _
  // Predicated region
  $region10: #{model_forward.1} parent=0 // pred_check
    _
  $region11: #{model_forward.1} parent=0 // pred_check_branch
    %38 = sbr.rel (0) target = $region13
  $region12: #{model_forward.1} parent=0 // pred_region
    _
  $region13: #{model_forward.1} parent=0 // pred_fallthru
    _
  // Predicated region
  $region14: #{model_forward.1} parent=0 // pred_check
    _
  $region15: #{model_forward.1} parent=0 // pred_check_branch
    %40 = sbr.rel (0) target = $region17
  $region16: #{model_forward.1} parent=0 // pred_region
    _
  $region17: #{model_forward.1} parent=0 // pred_fallthru
    _
  // Predicated region
  $region18: #{model_forward.1} parent=0 // pred_check
    _
  $region19: #{model_forward.1} parent=0 // pred_check_branch
    %42 = sbr.rel (0) target = $region21
  $region20: #{model_forward.1} parent=0 // pred_region
    _
  $region21: #{model_forward.1} parent=0 // pred_fallthru
    _
  // Predicated region
  $region22: #{model_forward.1} parent=0 // pred_check
    _
  $region23: #{model_forward.1} parent=0 // pred_check_branch
    %44 = sbr.rel (0) target = $region25
  $region24: #{model_forward.1} parent=0 // pred_region
    _
  $region25: #{model_forward.1} parent=0 // pred_fallthru
    _
  // Predicated region
  $region26: #{model_forward.1} parent=0 // pred_check
    _
  $region27: #{model_forward.1} parent=0 // pred_check_branch
    %46 = sbr.rel (0) target = $region29
  $region28: #{model_forward.1} parent=0 // pred_region
    _
  $region29: #{model_forward.1} parent=0 // pred_fallthru
    _
  // Predicated region
  $region30: #{model_forward.1} parent=0 // pred_check
    _
  $region31: #{model_forward.1} parent=0 // pred_check_branch
    %48 = sbr.rel (0) target = $region33
  $region32: #{model_forward.1} parent=0 // pred_region
    _
  $region33: #{model_forward.1} parent=0 // pred_fallthru
    _
  // Predicated region
  $region34: #{model_forward.1} parent=0 // pred_check
    _
  $region35: #{model_forward.1} parent=0 // pred_check_branch
    %50 = sbr.rel (0) target = $region37
  $region36: #{model_forward.1} parent=0 // pred_region
    _
  $region37: #{model_forward.1} parent=0 // pred_fallthru
    _
  // Predicated region
  $region38: #{model_forward.1} parent=0 // pred_check
    _
  $region39: #{model_forward.1} parent=0 // pred_check_branch
    %52 = sbr.rel (0) target = $region41
  $region40: #{model_forward.1} parent=0 // pred_region
    _
  $region41: #{model_forward.1} parent=0 // pred_fallthru
    _
  // Predicated region
  $region42: #{model_forward.1} parent=0 // pred_check
    _
  $region43: #{model_forward.1} parent=0 // pred_check_branch
    %54 = sbr.rel (0) target = $region45
  $region44: #{model_forward.1} parent=0 // pred_region
    _
  $region45: #{model_forward.1} parent=0 // pred_fallthru
    _
  // Predicated region
  $region46: #{model_forward.1} parent=0 // pred_check
    _
  $region47: #{model_forward.1} parent=0 // pred_check_branch
    %56 = sbr.rel (0) target = $region49
  $region48: #{model_forward.1} parent=0 // pred_region
    _
  $region49: #{model_forward.1} parent=0 // pred_fallthru
    _
  // Predicated region
  $region50: #{model_forward.1} parent=0 // pred_check
    _
  $region51: #{model_forward.1} parent=0 // pred_check_branch
    %58 = sbr.rel (0) target = $region53
  $region52: #{model_forward.1} parent=0 // pred_region
    _
  $region53: #{model_forward.1} parent=0 // pred_fallthru
    _
  // Predicated region
  $region54: #{model_forward.1} parent=0 // pred_check
    _
  $region55: #{model_forward.1} parent=0 // pred_check_branch
    %60 = sbr.rel (0) target = $region57
  $region56: #{model_forward.1} parent=0 // pred_region
    _
  $region57: #{model_forward.1} parent=0 // pred_fallthru
    _
  // Predicated region
  $region58: #{model_forward.1} parent=0 // pred_check
    _
  $region59: #{model_forward.1} parent=0 // pred_check_branch
    %62 = sbr.rel (0) target = $region61
  $region60: #{model_forward.1} parent=0 // pred_region
    _
  $region61: #{model_forward.1} parent=0 // pred_fallthru
    _
  // Predicated region
  $region62: #{model_forward.1} parent=0 // pred_check
    _
  $region63: #{model_forward.1} parent=0 // pred_check_branch
    %64 = sbr.rel (0) target = $region65
  $region64: #{model_forward.1} parent=0 // pred_region
    _
  $region65: #{model_forward.1} parent=0 // pred_fallthru
    _
  // Predicated region
  $region66: #{model_forward.1} parent=0 // pred_check
    _
  $region67: #{model_forward.1} parent=0 // pred_check_branch
    %66 = sbr.rel (0) target = $region69
  $region68: #{model_forward.1} parent=0 // pred_region
    _
  $region69: #{model_forward.1} parent=0 // pred_fallthru
    _
  // Predicated region
  $region70: #{model_forward.1} parent=0 // pred_check
    _
  $region71: #{model_forward.1} parent=0 // pred_check_branch
    %68 = sbr.rel (0) target = $region73
  $region72: #{model_forward.1} parent=0 // pred_region
    _
  $region73: #{model_forward.1} parent=0 // pred_fallthru
    _
  // Predicated region
  $region74: #{model_forward.1} parent=0 // pred_check
    _
  $region75: #{model_forward.1} parent=0 // pred_check_branch
    %70 = sbr.rel (0) target = $region77
  $region76: #{model_forward.1} parent=0 // pred_region
    _
  $region77: #{model_forward.1} parent=0 // pred_fallthru
    _
  // Predicated region
  $region78: #{model_forward.1} parent=0 // pred_check
    _
  $region79: #{model_forward.1} parent=0 // pred_check_branch
    %72 = sbr.rel (0) target = $region81
  $region80: #{model_forward.1} parent=0 // pred_region
    _
  $region81: #{model_forward.1} parent=0 // pred_fallthru
    _
  // Predicated region
  $region82: #{model_forward.1} parent=0 // pred_check
    _
  $region83: #{model_forward.1} parent=0 // pred_check_branch
    %74 = sbr.rel (0) target = $region85
  $region84: #{model_forward.1} parent=0 // pred_region
    _
  $region85: #{model_forward.1} parent=0 // pred_fallthru
    _
  // Predicated region
  $region86: #{model_forward.1} parent=0 // pred_check
    _
  $region87: #{model_forward.1} parent=0 // pred_check_branch
    %76 = sbr.rel (0) target = $region89
  $region88: #{model_forward.1} parent=0 // pred_region
    _
  $region89: #{model_forward.1} parent=0 // pred_fallthru
    _
  // Predicated region
  $region90: #{model_forward.1} parent=0 // pred_check
    _
  $region91: #{model_forward.1} parent=0 // pred_check_branch
    %78 = sbr.rel (0) target = $region93
  $region92: #{model_forward.1} parent=0 // pred_region
    _
  $region93: #{model_forward.1} parent=0 // pred_fallthru
    _
  // Predicated region
  $region94: #{model_forward.1} parent=0 // pred_check
    _
  $region95: #{model_forward.1} parent=0 // pred_check_branch
    %80 = sbr.rel (0) target = $region97
  $region96: #{model_forward.1} parent=0 // pred_region
    _
  $region97: #{model_forward.1} parent=0 // pred_fallthru
    _
  // Predicated region
  $region98: #{model_forward.1} parent=0 // pred_check
    _
  $region99: #{model_forward.1} parent=0 // pred_check_branch
    %82 = sbr.rel (0) target = $region101
  $region100: #{model_forward.1} parent=0 // pred_region
    _
  $region101: #{model_forward.1} parent=0 // pred_fallthru
    _
  // Predicated region
  $region102: #{model_forward.1} parent=0 // pred_check
    _
  $region103: #{model_forward.1} parent=0 // pred_check_branch
    %84 = sbr.rel (0) target = $region105
  $region104: #{model_forward.1} parent=0 // pred_region
    _
  $region105: #{model_forward.1} parent=0 // pred_fallthru
    _
  %v86 = vlaneseq
  %v87 = vand.u32 %v86, 127
  %v88 = vld [vmem:[%s0] sm:$0xff]
  %v89 = vld [vmem:[%s0 + $0x8] sm:$0xff]
  %90 = vset.pattern.permute.xlu0 0
  %91 = vperm.xlu0 %90, %v88
  %v92 = vpop.permute.xlu0 %91
  %93 = vset.pattern.permute.xlu0 0
  %94 = vperm.xlu0 %93, %v89
  %v95 = vpop.permute.xlu0 %94
  %vm96 = vcmp.eq.s32.totalorder %v92, %v87
  %vm97 = vcmp.eq.s32.totalorder %v95, %v87
  %v98 = vsel %vm96, 1, 0
  %v99 = vsel %vm97, 1, 0
  %v100 = vcvt.s32.f32 %v98
  %v101 = vcvt.s32.f32 %v99
  %v102 = vpack.c.bf16 %v101, %v100
  %v103 = vld [vmem:[%s1] sm:$0xf]
  %v104 = vld [vmem:[%s1 + $0x4] sm:$0xf]
  %v105 = vld [vmem:[%s1 + $0x8] sm:$0xf]
  %v106 = vld [vmem:[%s1 + $0xc] sm:$0xf]
  %v111 = vunpack.c.l.b16 %v103
  %v112 = vunpack.c.l.b16 %v104
  %v113 = vunpack.c.l.b16 %v105
  %v114 = vunpack.c.l.b16 %v106
  %v115 = vpack.c.b16 %v112, %v111
  %v116 = vpack.c.b16 %v114, %v113
  %vm119 = vcmask 261120
  %v121 = vsel %vm119, %v102, 0
  %123 = vmatprep.subr.bf16.mxu0 0
  %124 = vmatpush1.bf16.msra.mxu0 %v115
  %125 = vmatprep.subr.bf16.mxu0 0
  %126 = vmatpush1.bf16.msra.mxu0 %v116
  %127 = vmatprep.subr.bf16.mxu0 0
  %128 = vmatpush1.bf16.msra.mxu0 0
  %129 = vmatprep.subr.bf16.mxu0 0
  %130 = vmatpush1.bf16.msra.mxu0 0
  %131 = vmatprep.subr.bf16.mxu0 0
  %132 = vmatpush1.bf16.msra.mxu0 0
  %133 = vmatprep.subr.bf16.mxu0 0
  %134 = vmatpush1.bf16.msra.mxu0 0
  %135 = vmatprep.subr.bf16.mxu0 0
  %136 = vmatpush1.bf16.msra.mxu0 0
  %137 = vmatprep.subr.bf16.mxu0 0
  %138 = vmatpush1.bf16.msra.mxu0 0
  %139 = vmatprep.subr.bf16.mxu0 0
  %140 = vmatpush1.bf16.msra.mxu0 0
  %141 = vmatprep.subr.bf16.mxu0 0
  %142 = vmatpush1.bf16.msra.mxu0 0
  %143 = vmatprep.subr.bf16.mxu0 0
  %144 = vmatpush1.bf16.msra.mxu0 0
  %145 = vmatprep.subr.bf16.mxu0 0
  %146 = vmatpush1.bf16.msra.mxu0 0
  %147 = vmatprep.subr.bf16.mxu0 0
  %148 = vmatpush1.bf16.msra.mxu0 0
  %149 = vmatprep.subr.bf16.mxu0 0
  %150 = vmatpush1.bf16.msra.mxu0 0
  %151 = vmatprep.subr.bf16.mxu0 0
  %152 = vmatpush1.bf16.msra.mxu0 0
  %153 = vmatprep.subr.bf16.mxu0 0
  %154 = vmatpush1.bf16.msra.mxu0 0
  %155 = vmatprep.mubr.bf16.mxu0 0
  %156 = vmatmul.mubr.bf16.gmra.mrb[0].mxu0 %v121
  %v157 = vpop.f32.mrb[0].mxu0
  %v158 = vadd.f32 0.0, %v157
  %v159 = vpop.f32.mrb[0].mxu0
  %v160 = vpop.f32.mrb[0].mxu0
  %v161 = vadd.f32 0.0, %v160
  %v162 = vpop.f32.mrb[0].mxu0
  %163 = vdwg.mxu0
  %v164 = vpack.c.bf16 %v161, %v158
  %v165 = vld [vmem:[%s2] sm:$0xf]
  %v166 = vld [vmem:[%s2 + $0x4] sm:$0xf]
  %v167 = vld [vmem:[%s3] sm:$0x1]
  %v169 = vlaneseq
  %v170 = vshrl.u32 %v169, 7
  %v171 = vsub.s32 0, %v170
  %v172 = vrot.slane %v167, %v171
  %v176 = vunpack.c.l.b16 %v165
  %v177 = vunpack.c.l.b16 %v166
  %v178 = vpack.c.b16 %v177, %v176
  %vm180 = vcmask 130048
  %v182 = vsel %vm180, %v164, 0
  %184 = vmatprep.subr.bf16.mxu0 0
  %185 = vmatpush1.bf16.msra.mxu0 %v178
  %186 = vmatprep.subr.bf16.mxu0 0
  %187 = vmatpush1.bf16.msra.mxu0 0
  %188 = vmatprep.subr.bf16.mxu0 0
  %189 = vmatpush1.bf16.msra.mxu0 0
  %190 = vmatprep.subr.bf16.mxu0 0
  %191 = vmatpush1.bf16.msra.mxu0 0
  %192 = vmatprep.subr.bf16.mxu0 0
  %193 = vmatpush1.bf16.msra.mxu0 0
  %194 = vmatprep.subr.bf16.mxu0 0
  %195 = vmatpush1.bf16.msra.mxu0 0
  %196 = vmatprep.subr.bf16.mxu0 0
  %197 = vmatpush1.bf16.msra.mxu0 0
  %198 = vmatprep.subr.bf16.mxu0 0
  %199 = vmatpush1.bf16.msra.mxu0 0
  %200 = vmatprep.subr.bf16.mxu0 0
  %201 = vmatpush1.bf16.msra.mxu0 0
  %202 = vmatprep.subr.bf16.mxu0 0
  %203 = vmatpush1.bf16.msra.mxu0 0
  %204 = vmatprep.subr.bf16.mxu0 0
  %205 = vmatpush1.bf16.msra.mxu0 0
  %206 = vmatprep.subr.bf16.mxu0 0
  %207 = vmatpush1.bf16.msra.mxu0 0
  %208 = vmatprep.subr.bf16.mxu0 0
  %209 = vmatpush1.bf16.msra.mxu0 0
  %210 = vmatprep.subr.bf16.mxu0 0
  %211 = vmatpush1.bf16.msra.mxu0 0
  %212 = vmatprep.subr.bf16.mxu0 0
  %213 = vmatpush1.bf16.msra.mxu0 0
  %214 = vmatprep.subr.bf16.mxu0 0
  %215 = vmatpush1.bf16.msra.mxu0 0
  %216 = vmatprep.mubr.bf16.mxu0 0
  %217 = vmatmul.mubr.bf16.gmra.mrb[0].mxu0 %v182
  %v218 = vpop.f32.mrb[0].mxu0
  %v219 = vadd.f32 %v172, %v218
  %v220 = vpop.f32.mrb[0].mxu0
  %v221 = vpop.f32.mrb[0].mxu0
  %v222 = vadd.f32 %v172, %v221
  %v223 = vpop.f32.mrb[0].mxu0
  %224 = vdwg.mxu0
  %v225 = vmax.f32 %v219, 0.0
  %v226 = vmax.f32 %v222, 0.0
  %v227 = vpack.c.bf16 %v226, %v225
  %v228 = vld [vmem:[%s4] sm:$0xf]
  %v229 = vld [vmem:[%s4 + $0x4] sm:$0xf]
  %v230 = vld [vmem:[%s5] sm:$0x1]
  %v232 = vlaneseq
  %v233 = vshrl.u32 %v232, 7
  %v234 = vsub.s32 0, %v233
  %v235 = vrot.slane %v230, %v234
  %v239 = vunpack.c.l.b16 %v228
  %v240 = vunpack.c.l.b16 %v229
  %v241 = vpack.c.b16 %v240, %v239
  %v244 = vsel %vm180, %v227, 0
  %246 = vmatprep.subr.bf16.mxu0 0
  %247 = vmatpush1.bf16.msra.mxu0 %v241
  %248 = vmatprep.subr.bf16.mxu0 0
  %249 = vmatpush1.bf16.msra.mxu0 0
  %250 = vmatprep.subr.bf16.mxu0 0
  %251 = vmatpush1.bf16.msra.mxu0 0
  %252 = vmatprep.subr.bf16.mxu0 0
  %253 = vmatpush1.bf16.msra.mxu0 0
  %254 = vmatprep.subr.bf16.mxu0 0
  %255 = vmatpush1.bf16.msra.mxu0 0
  %256 = vmatprep.subr.bf16.mxu0 0
  %257 = vmatpush1.bf16.msra.mxu0 0
  %258 = vmatprep.subr.bf16.mxu0 0
  %259 = vmatpush1.bf16.msra.mxu0 0
  %260 = vmatprep.subr.bf16.mxu0 0
  %261 = vmatpush1.bf16.msra.mxu0 0
  %262 = vmatprep.subr.bf16.mxu0 0
  %263 = vmatpush1.bf16.msra.mxu0 0
  %264 = vmatprep.subr.bf16.mxu0 0
  %265 = vmatpush1.bf16.msra.mxu0 0
  %266 = vmatprep.subr.bf16.mxu0 0
  %267 = vmatpush1.bf16.msra.mxu0 0
  %268 = vmatprep.subr.bf16.mxu0 0
  %269 = vmatpush1.bf16.msra.mxu0 0
  %270 = vmatprep.subr.bf16.mxu0 0
  %271 = vmatpush1.bf16.msra.mxu0 0
  %272 = vmatprep.subr.bf16.mxu0 0
  %273 = vmatpush1.bf16.msra.mxu0 0
  %274 = vmatprep.subr.bf16.mxu0 0
  %275 = vmatpush1.bf16.msra.mxu0 0
  %276 = vmatprep.subr.bf16.mxu0 0
  %277 = vmatpush1.bf16.msra.mxu0 0
  %278 = vmatprep.mubr.bf16.mxu0 0
  %279 = vmatmul.mubr.bf16.gmra.mrb[0].mxu0 %v244
  %v280 = vpop.f32.mrb[0].mxu0
  %v281 = vadd.f32 %v235, %v280
  %v282 = vpop.f32.mrb[0].mxu0
  %v283 = vpop.f32.mrb[0].mxu0
  %v284 = vadd.f32 %v235, %v283
  %v285 = vpop.f32.mrb[0].mxu0
  %286 = vdwg.mxu0
  %v287 = vmax.f32 %v281, 0.0
  %v288 = vmax.f32 %v284, 0.0
  %v289 = vpack.c.bf16 %v288, %v287
  %v290 = vld [vmem:[%s6] sm:$0xf]
  %v291 = vld [vmem:[%s6 + $0x4] sm:$0xf]
  %v292 = vld [vmem:[%s7] sm:$0x1]
  %v294 = vlaneseq
  %v295 = vshrl.u32 %v294, 7
  %v296 = vsub.s32 0, %v295
  %v297 = vrot.slane %v292, %v296
  %v301 = vunpack.c.l.b16 %v290
  %v302 = vunpack.c.l.b16 %v291
  %v303 = vpack.c.b16 %v302, %v301
  %v306 = vsel %vm180, %v289, 0
  %308 = vmatprep.subr.bf16.mxu0 0
  %309 = vmatpush1.bf16.msra.mxu0 %v303
  %310 = vmatprep.subr.bf16.mxu0 0
  %311 = vmatpush1.bf16.msra.mxu0 0
  %312 = vmatprep.subr.bf16.mxu0 0
  %313 = vmatpush1.bf16.msra.mxu0 0
  %314 = vmatprep.subr.bf16.mxu0 0
  %315 = vmatpush1.bf16.msra.mxu0 0
  %316 = vmatprep.subr.bf16.mxu0 0
  %317 = vmatpush1.bf16.msra.mxu0 0
  %318 = vmatprep.subr.bf16.mxu0 0
  %319 = vmatpush1.bf16.msra.mxu0 0
  %320 = vmatprep.subr.bf16.mxu0 0
  %321 = vmatpush1.bf16.msra.mxu0 0
  %322 = vmatprep.subr.bf16.mxu0 0
  %323 = vmatpush1.bf16.msra.mxu0 0
  %324 = vmatprep.subr.bf16.mxu0 0
  %325 = vmatpush1.bf16.msra.mxu0 0
  %326 = vmatprep.subr.bf16.mxu0 0
  %327 = vmatpush1.bf16.msra.mxu0 0
  %328 = vmatprep.subr.bf16.mxu0 0
  %329 = vmatpush1.bf16.msra.mxu0 0
  %330 = vmatprep.subr.bf16.mxu0 0
  %331 = vmatpush1.bf16.msra.mxu0 0
  %332 = vmatprep.subr.bf16.mxu0 0
  %333 = vmatpush1.bf16.msra.mxu0 0
  %334 = vmatprep.subr.bf16.mxu0 0
  %335 = vmatpush1.bf16.msra.mxu0 0
  %336 = vmatprep.subr.bf16.mxu0 0
  %337 = vmatpush1.bf16.msra.mxu0 0
  %338 = vmatprep.subr.bf16.mxu0 0
  %339 = vmatpush1.bf16.msra.mxu0 0
  %340 = vmatprep.mubr.bf16.mxu0 0
  %341 = vmatmul.mubr.bf16.gmra.mrb[0].mxu0 %v306
  %v342 = vpop.f32.mrb[0].mxu0
  %v343 = vadd.f32 %v297, %v342
  %v344 = vpop.f32.mrb[0].mxu0
  %v345 = vpop.f32.mrb[0].mxu0
  %v346 = vadd.f32 %v297, %v345
  %v347 = vpop.f32.mrb[0].mxu0
  %348 = vdwg.mxu0
  %v349 = vld [vmem:[%s8] sm:$0xf]
  %v350 = vld [vmem:[%s8 + $0x4] sm:$0xf]
  %v351 = vld [vmem:[%s10] sm:$0x1]
  %v353 = vlaneseq
  %v354 = vshrl.u32 %v353, 7
  %v355 = vsub.s32 0, %v354
  %v356 = vrot.slane %v351, %v355
  %359 = vrot.lane.b32.xlu0 %v164, 112
  %v360 = vpop.permute.xlu0 %359
  %v363 = vunpack.c.l.b16 %v349
  %v364 = vunpack.c.l.b16 %v350
  %v365 = vpack.c.b16 %v364, %v363
  %v368 = vsel %vm180, %v360, 0
  %370 = vmatprep.subr.bf16.mxu0 0
  %371 = vmatpush1.bf16.msra.mxu0 %v365
  %372 = vmatprep.subr.bf16.mxu0 0
  %373 = vmatpush1.bf16.msra.mxu0 0
  %374 = vmatprep.subr.bf16.mxu0 0
  %375 = vmatpush1.bf16.msra.mxu0 0
  %376 = vmatprep.subr.bf16.mxu0 0
  %377 = vmatpush1.bf16.msra.mxu0 0
  %378 = vmatprep.subr.bf16.mxu0 0
  %379 = vmatpush1.bf16.msra.mxu0 0
  %380 = vmatprep.subr.bf16.mxu0 0
  %381 = vmatpush1.bf16.msra.mxu0 0
  %382 = vmatprep.subr.bf16.mxu0 0
  %383 = vmatpush1.bf16.msra.mxu0 0
  %384 = vmatprep.subr.bf16.mxu0 0
  %385 = vmatpush1.bf16.msra.mxu0 0
  %386 = vmatprep.subr.bf16.mxu0 0
  %387 = vmatpush1.bf16.msra.mxu0 0
  %388 = vmatprep.subr.bf16.mxu0 0
  %389 = vmatpush1.bf16.msra.mxu0 0
  %390 = vmatprep.subr.bf16.mxu0 0
  %391 = vmatpush1.bf16.msra.mxu0 0
  %392 = vmatprep.subr.bf16.mxu0 0
  %393 = vmatpush1.bf16.msra.mxu0 0
  %394 = vmatprep.subr.bf16.mxu0 0
  %395 = vmatpush1.bf16.msra.mxu0 0
  %396 = vmatprep.subr.bf16.mxu0 0
  %397 = vmatpush1.bf16.msra.mxu0 0
  %398 = vmatprep.subr.bf16.mxu0 0
  %399 = vmatpush1.bf16.msra.mxu0 0
  %400 = vmatprep.subr.bf16.mxu0 0
  %401 = vmatpush1.bf16.msra.mxu0 0
  %402 = vmatprep.mubr.bf16.mxu0 0
  %403 = vmatmul.mubr.bf16.gmra.mrb[0].mxu0 %v368
  %v404 = vpop.f32.mrb[0].mxu0
  %v405 = vadd.f32 %v356, %v404
  %v406 = vpop.f32.mrb[0].mxu0
  %v407 = vpop.f32.mrb[0].mxu0
  %v408 = vadd.f32 %v356, %v407
  %v409 = vpop.f32.mrb[0].mxu0
  %410 = vdwg.mxu0
  %v411 = vld [vmem:[%s9] sm:$0xf]
  %v412 = vld [vmem:[%s9 + $0x4] sm:$0xf]
  %v415 = vunpack.c.l.b16 %v411
  %v416 = vunpack.c.l.b16 %v412
  %v417 = vpack.c.b16 %v416, %v415
  %419 = vmatprep.subr.bf16.mxu0 0
  %420 = vmatpush1.bf16.msra.mxu0 %v417
  %421 = vmatprep.subr.bf16.mxu0 0
  %422 = vmatpush1.bf16.msra.mxu0 0
  %423 = vmatprep.subr.bf16.mxu0 0
  %424 = vmatpush1.bf16.msra.mxu0 0
  %425 = vmatprep.subr.bf16.mxu0 0
  %426 = vmatpush1.bf16.msra.mxu0 0
  %427 = vmatprep.subr.bf16.mxu0 0
  %428 = vmatpush1.bf16.msra.mxu0 0
  %429 = vmatprep.subr.bf16.mxu0 0
  %430 = vmatpush1.bf16.msra.mxu0 0
  %431 = vmatprep.subr.bf16.mxu0 0
  %432 = vmatpush1.bf16.msra.mxu0 0
  %433 = vmatprep.subr.bf16.mxu0 0
  %434 = vmatpush1.bf16.msra.mxu0 0
  %435 = vmatprep.subr.bf16.mxu0 0
  %436 = vmatpush1.bf16.msra.mxu0 0
  %437 = vmatprep.subr.bf16.mxu0 0
  %438 = vmatpush1.bf16.msra.mxu0 0
  %439 = vmatprep.subr.bf16.mxu0 0
  %440 = vmatpush1.bf16.msra.mxu0 0
  %441 = vmatprep.subr.bf16.mxu0 0
  %442 = vmatpush1.bf16.msra.mxu0 0
  %443 = vmatprep.subr.bf16.mxu0 0
  %444 = vmatpush1.bf16.msra.mxu0 0
  %445 = vmatprep.subr.bf16.mxu0 0
  %446 = vmatpush1.bf16.msra.mxu0 0
  %447 = vmatprep.subr.bf16.mxu0 0
  %448 = vmatpush1.bf16.msra.mxu0 0
  %449 = vmatprep.subr.bf16.mxu0 0
  %450 = vmatpush1.bf16.msra.mxu0 0
  %451 = vmatprep.mubr.bf16.mxu0 0
  %452 = vmatmul.mubr.bf16.gmra.mrb[0].mxu0 %v368
  %v453 = vpop.f32.mrb[0].mxu0
  %v454 = vadd.f32 0.0, %v453
  %v455 = vpop.f32.mrb[0].mxu0
  %v456 = vpop.f32.mrb[0].mxu0
  %v457 = vadd.f32 0.0, %v456
  %v458 = vpop.f32.mrb[0].mxu0
  %459 = vdwg.mxu0
  %v462 = vrot.slane %v454, 7
  %v463 = vrot.slane %v457, 7
  %v466 = vadd.f32 %v405, %v462
  %v467 = vadd.f32 %v408, %v463
  %v468 = vld [vmem:[%s11] sm:$0xf]
  %v469 = vld [vmem:[%s11 + $0x4] sm:$0xf]
  %v470 = vld [vmem:[%s11 + $0x8] sm:$0xf]
  %v471 = vld [vmem:[%s11 + $0xc] sm:$0xf]
  %v476 = vunpack.c.l.b16 %v468
  %v477 = vunpack.c.l.b16 %v469
  %v478 = vunpack.c.l.b16 %v470
  %v479 = vunpack.c.l.b16 %v471
  %v480 = vpack.c.b16 %v477, %v476
  %v481 = vpack.c.b16 %v479, %v478
  %v486 = vrot.slane %v467, 7
  %vm487 = vcmask 1041409
  %v488 = vsel %vm487, %v486, %v466
  %v491 = vsel %vm119, 0, 0
  %493 = vmatprep.subr.bf16.mxu0 0
  %494 = vmatpush1.bf16.msra.mxu0 %v480
  %495 = vmatprep.subr.bf16.mxu0 0
  %496 = vmatpush1.bf16.msra.mxu0 %v481
  %497 = vmatprep.subr.bf16.mxu0 0
  %498 = vmatpush1.bf16.msra.mxu0 0
  %499 = vmatprep.subr.bf16.mxu0 0
  %500 = vmatpush1.bf16.msra.mxu0 0
  %501 = vmatprep.subr.bf16.mxu0 0
  %502 = vmatpush1.bf16.msra.mxu0 0
  %503 = vmatprep.subr.bf16.mxu0 0
  %504 = vmatpush1.bf16.msra.mxu0 0
  %505 = vmatprep.subr.bf16.mxu0 0
  %506 = vmatpush1.bf16.msra.mxu0 0
  %507 = vmatprep.subr.bf16.mxu0 0
  %508 = vmatpush1.bf16.msra.mxu0 0
  %509 = vmatprep.subr.bf16.mxu0 0
  %510 = vmatpush1.bf16.msra.mxu0 0
  %511 = vmatprep.subr.bf16.mxu0 0
  %512 = vmatpush1.bf16.msra.mxu0 0
  %513 = vmatprep.subr.bf16.mxu0 0
  %514 = vmatpush1.bf16.msra.mxu0 0
  %515 = vmatprep.subr.bf16.mxu0 0
  %516 = vmatpush1.bf16.msra.mxu0 0
  %517 = vmatprep.subr.bf16.mxu0 0
  %518 = vmatpush1.bf16.msra.mxu0 0
  %519 = vmatprep.subr.bf16.mxu0 0
  %520 = vmatpush1.bf16.msra.mxu0 0
  %521 = vmatprep.subr.bf16.mxu0 0
  %522 = vmatpush1.bf16.msra.mxu0 0
  %523 = vmatprep.subr.bf16.mxu0 0
  %524 = vmatpush1.bf16.msra.mxu0 0
  %525 = vmatprep.mubr.bf16.mxu0 0
  %526 = vmatmul.mubr.bf16.gmra.mrb[0].mxu0 %v491
  %v527 = vpop.f32.mrb[0].mxu0
  %v528 = vadd.f32 %v488, %v527
  %v529 = vpop.f32.mrb[0].mxu0
  %v530 = vpop.f32.mrb[0].mxu0
  %v531 = vpop.f32.mrb[0].mxu0
  %532 = vdwg.mxu0
  %v533 = vxor.u32 %v528, 2147483648
  %v534 = vmul.f32 %v533, 1.442695
  %v535 = vpow.pop %v534
  %v536 = vadd.f32 %v535, 1.0
  %v537 = vrcp.pop %v536
  %v538 = vmul.f32 1.0, %v537
  %v539 = vtanh.pop %v528
  %v540 = vmul.f32 %v538, 0.0
  %542 = vrot.lane.b32.xlu0 %v539, 64
  %v543 = vpop.permute.xlu0 %542
  %v545 = vmul.f32 %v538, %v543
  %547 = vrot.lane.b32.xlu0 %v545, 32
  %v548 = vpop.permute.xlu0 %547
  %v550 = vadd.f32 %v540, %v548
  %v551 = vtanh.pop %v550
  %553 = vrot.lane.b32.xlu0 %v551, 64
  %v554 = vpop.permute.xlu0 %553
  %v556 = vmul.f32 %v538, %v554
  %v557 = vrot.slane %v454, 5
  %v558 = vrot.slane %v457, 5
  %v561 = vadd.f32 %v405, %v557
  %v562 = vadd.f32 %v408, %v558
  %v563 = vpack.c.bf16 %v556, %v556
  %565 = vrot.lane.b32.xlu0 %v563, 32
  %v566 = vpop.permute.xlu0 %565
  %v569 = vrot.slane %v561, 1
  %v570 = vsel %vm487, %v562, %v569
  %v573 = vsel %vm119, %v566, 0
  %575 = vmatprep.subr.bf16.mxu0 0
  %576 = vmatpush1.bf16.msra.mxu0 %v480
  %577 = vmatprep.subr.bf16.mxu0 0
  %578 = vmatpush1.bf16.msra.mxu0 %v481
  %579 = vmatprep.subr.bf16.mxu0 0
  %580 = vmatpush1.bf16.msra.mxu0 0
  %581 = vmatprep.subr.bf16.mxu0 0
  %582 = vmatpush1.bf16.msra.mxu0 0
  %583 = vmatprep.subr.bf16.mxu0 0
  %584 = vmatpush1.bf16.msra.mxu0 0
  %585 = vmatprep.subr.bf16.mxu0 0
  %586 = vmatpush1.bf16.msra.mxu0 0
  %587 = vmatprep.subr.bf16.mxu0 0
  %588 = vmatpush1.bf16.msra.mxu0 0
  %589 = vmatprep.subr.bf16.mxu0 0
  %590 = vmatpush1.bf16.msra.mxu0 0
  %591 = vmatprep.subr.bf16.mxu0 0
  %592 = vmatpush1.bf16.msra.mxu0 0
  %593 = vmatprep.subr.bf16.mxu0 0
  %594 = vmatpush1.bf16.msra.mxu0 0
  %595 = vmatprep.subr.bf16.mxu0 0
  %596 = vmatpush1.bf16.msra.mxu0 0
  %597 = vmatprep.subr.bf16.mxu0 0
  %598 = vmatpush1.bf16.msra.mxu0 0
  %599 = vmatprep.subr.bf16.mxu0 0
  %600 = vmatpush1.bf16.msra.mxu0 0
  %601 = vmatprep.subr.bf16.mxu0 0
  %602 = vmatpush1.bf16.msra.mxu0 0
  %603 = vmatprep.subr.bf16.mxu0 0
  %604 = vmatpush1.bf16.msra.mxu0 0
  %605 = vmatprep.subr.bf16.mxu0 0
  %606 = vmatpush1.bf16.msra.mxu0 0
  %607 = vmatprep.mubr.bf16.mxu0 0
  %608 = vmatmul.mubr.bf16.gmra.mrb[0].mxu0 %v573
  %v609 = vpop.f32.mrb[0].mxu0
  %v610 = vadd.f32 %v570, %v609
  %v611 = vpop.f32.mrb[0].mxu0
  %v612 = vpop.f32.mrb[0].mxu0
  %v613 = vpop.f32.mrb[0].mxu0
  %614 = vdwg.mxu0
  %v615 = vxor.u32 %v610, 2147483648
  %v616 = vmul.f32 %v615, 1.442695
  %v617 = vpow.pop %v616
  %v618 = vadd.f32 %v617, 1.0
  %v619 = vrcp.pop %v618
  %v620 = vmul.f32 1.0, %v619
  %v621 = vtanh.pop %v610
  %v622 = vmul.f32 %v620, %v550
  %624 = vrot.lane.b32.xlu0 %v621, 64
  %v625 = vpop.permute.xlu0 %624
  %v627 = vmul.f32 %v620, %v625
  %629 = vrot.lane.b32.xlu0 %v627, 32
  %v630 = vpop.permute.xlu0 %629
  %v632 = vadd.f32 %v622, %v630
  %v633 = vtanh.pop %v632
  %635 = vrot.lane.b32.xlu0 %v633, 64
  %v636 = vpop.permute.xlu0 %635
  %v638 = vmul.f32 %v620, %v636
  %v639 = vrot.slane %v454, 3
  %v640 = vrot.slane %v457, 3
  %v643 = vadd.f32 %v405, %v639
  %v644 = vadd.f32 %v408, %v640
  %v645 = vpack.c.bf16 %v638, %v638
  %647 = vrot.lane.b32.xlu0 %v645, 32
  %v648 = vpop.permute.xlu0 %647
  %v651 = vrot.slane %v643, 2
  %v652 = vrot.slane %v644, 1
  %v653 = vsel %vm487, %v652, %v651
  %v656 = vsel %vm119, %v648, 0
  %658 = vmatprep.subr.bf16.mxu0 0
  %659 = vmatpush1.bf16.msra.mxu0 %v480
  %660 = vmatprep.subr.bf16.mxu0 0
  %661 = vmatpush1.bf16.msra.mxu0 %v481
  %662 = vmatprep.subr.bf16.mxu0 0
  %663 = vmatpush1.bf16.msra.mxu0 0
  %664 = vmatprep.subr.bf16.mxu0 0
  %665 = vmatpush1.bf16.msra.mxu0 0
  %666 = vmatprep.subr.bf16.mxu0 0
  %667 = vmatpush1.bf16.msra.mxu0 0
  %668 = vmatprep.subr.bf16.mxu0 0
  %669 = vmatpush1.bf16.msra.mxu0 0
  %670 = vmatprep.subr.bf16.mxu0 0
  %671 = vmatpush1.bf16.msra.mxu0 0
  %672 = vmatprep.subr.bf16.mxu0 0
  %673 = vmatpush1.bf16.msra.mxu0 0
  %674 = vmatprep.subr.bf16.mxu0 0
  %675 = vmatpush1.bf16.msra.mxu0 0
  %676 = vmatprep.subr.bf16.mxu0 0
  %677 = vmatpush1.bf16.msra.mxu0 0
  %678 = vmatprep.subr.bf16.mxu0 0
  %679 = vmatpush1.bf16.msra.mxu0 0
  %680 = vmatprep.subr.bf16.mxu0 0
  %681 = vmatpush1.bf16.msra.mxu0 0
  %682 = vmatprep.subr.bf16.mxu0 0
  %683 = vmatpush1.bf16.msra.mxu0 0
  %684 = vmatprep.subr.bf16.mxu0 0
  %685 = vmatpush1.bf16.msra.mxu0 0
  %686 = vmatprep.subr.bf16.mxu0 0
  %687 = vmatpush1.bf16.msra.mxu0 0
  %688 = vmatprep.subr.bf16.mxu0 0
  %689 = vmatpush1.bf16.msra.mxu0 0
  %690 = vmatprep.mubr.bf16.mxu0 0
  %691 = vmatmul.mubr.bf16.gmra.mrb[0].mxu0 %v656
  %v692 = vpop.f32.mrb[0].mxu0
  %v693 = vadd.f32 %v653, %v692
  %v694 = vpop.f32.mrb[0].mxu0
  %v695 = vpop.f32.mrb[0].mxu0
  %v696 = vpop.f32.mrb[0].mxu0
  %697 = vdwg.mxu0
  %v698 = vxor.u32 %v693, 2147483648
  %v699 = vmul.f32 %v698, 1.442695
  %v700 = vpow.pop %v699
  %v701 = vadd.f32 %v700, 1.0
  %v702 = vrcp.pop %v701
  %v703 = vmul.f32 1.0, %v702
  %v704 = vtanh.pop %v693
  %v705 = vmul.f32 %v703, %v632
  %707 = vrot.lane.b32.xlu0 %v704, 64
  %v708 = vpop.permute.xlu0 %707
  %v710 = vmul.f32 %v703, %v708
  %712 = vrot.lane.b32.xlu0 %v710, 32
  %v713 = vpop.permute.xlu0 %712
  %v715 = vadd.f32 %v705, %v713
  %v716 = vtanh.pop %v715
  %718 = vrot.lane.b32.xlu0 %v716, 64
  %v719 = vpop.permute.xlu0 %718
  %v721 = vmul.f32 %v703, %v719
  %v722 = vrot.slane %v454, 1
  %v723 = vrot.slane %v457, 1
  %v726 = vadd.f32 %v405, %v722
  %v727 = vadd.f32 %v408, %v723
  %v728 = vpack.c.bf16 %v721, %v721
  %730 = vrot.lane.b32.xlu0 %v728, 32
  %v731 = vpop.permute.xlu0 %730
  %v734 = vrot.slane %v726, 3
  %v735 = vrot.slane %v727, 2
  %v736 = vsel %vm487, %v735, %v734
  %v739 = vsel %vm119, %v731, 0
  %741 = vmatprep.subr.bf16.mxu0 0
  %742 = vmatpush1.bf16.msra.mxu0 %v480
  %743 = vmatprep.subr.bf16.mxu0 0
  %744 = vmatpush1.bf16.msra.mxu0 %v481
  %745 = vmatprep.subr.bf16.mxu0 0
  %746 = vmatpush1.bf16.msra.mxu0 0
  %747 = vmatprep.subr.bf16.mxu0 0
  %748 = vmatpush1.bf16.msra.mxu0 0
  %749 = vmatprep.subr.bf16.mxu0 0
  %750 = vmatpush1.bf16.msra.mxu0 0
  %751 = vmatprep.subr.bf16.mxu0 0
  %752 = vmatpush1.bf16.msra.mxu0 0
  %753 = vmatprep.subr.bf16.mxu0 0
  %754 = vmatpush1.bf16.msra.mxu0 0
  %755 = vmatprep.subr.bf16.mxu0 0
  %756 = vmatpush1.bf16.msra.mxu0 0
  %757 = vmatprep.subr.bf16.mxu0 0
  %758 = vmatpush1.bf16.msra.mxu0 0
  %759 = vmatprep.subr.bf16.mxu0 0
  %760 = vmatpush1.bf16.msra.mxu0 0
  %761 = vmatprep.subr.bf16.mxu0 0
  %762 = vmatpush1.bf16.msra.mxu0 0
  %763 = vmatprep.subr.bf16.mxu0 0
  %764 = vmatpush1.bf16.msra.mxu0 0
  %765 = vmatprep.subr.bf16.mxu0 0
  %766 = vmatpush1.bf16.msra.mxu0 0
  %767 = vmatprep.subr.bf16.mxu0 0
  %768 = vmatpush1.bf16.msra.mxu0 0
  %769 = vmatprep.subr.bf16.mxu0 0
  %770 = vmatpush1.bf16.msra.mxu0 0
  %771 = vmatprep.subr.bf16.mxu0 0
  %772 = vmatpush1.bf16.msra.mxu0 0
  %773 = vmatprep.mubr.bf16.mxu0 0
  %774 = vmatmul.mubr.bf16.gmra.mrb[0].mxu0 %v739
  %v775 = vpop.f32.mrb[0].mxu0
  %v776 = vadd.f32 %v736, %v775
  %v777 = vpop.f32.mrb[0].mxu0
  %v778 = vpop.f32.mrb[0].mxu0
  %v779 = vpop.f32.mrb[0].mxu0
  %780 = vdwg.mxu0
  %v781 = vxor.u32 %v776, 2147483648
  %v782 = vmul.f32 %v781, 1.442695
  %v783 = vpow.pop %v782
  %v784 = vadd.f32 %v783, 1.0
  %v785 = vrcp.pop %v784
  %v786 = vmul.f32 1.0, %v785
  %v787 = vtanh.pop %v776
  %v788 = vmul.f32 %v786, %v715
  %790 = vrot.lane.b32.xlu0 %v787, 64
  %v791 = vpop.permute.xlu0 %790
  %v793 = vmul.f32 %v786, %v791
  %795 = vrot.lane.b32.xlu0 %v793, 32
  %v796 = vpop.permute.xlu0 %795
  %v798 = vadd.f32 %v788, %v796
  %v799 = vtanh.pop %v798
  %801 = vrot.lane.b32.xlu0 %v799, 64
  %v802 = vpop.permute.xlu0 %801
  %v804 = vmul.f32 %v786, %v802
  %v805 = vpack.c.bf16 %v804, %v804
  %807 = vrot.lane.b32.xlu0 %v805, 32
  %v808 = vpop.permute.xlu0 %807
  %v809 = vrot.slane %v466, 4
  %v810 = vrot.slane %v467, 3
  %v811 = vsel %vm487, %v810, %v809
  %v814 = vsel %vm119, %v808, 0
  %816 = vmatprep.subr.bf16.mxu0 0
  %817 = vmatpush1.bf16.msra.mxu0 %v480
  %818 = vmatprep.subr.bf16.mxu0 0
  %819 = vmatpush1.bf16.msra.mxu0 %v481
  %820 = vmatprep.subr.bf16.mxu0 0
  %821 = vmatpush1.bf16.msra.mxu0 0
  %822 = vmatprep.subr.bf16.mxu0 0
  %823 = vmatpush1.bf16.msra.mxu0 0
  %824 = vmatprep.subr.bf16.mxu0 0
  %825 = vmatpush1.bf16.msra.mxu0 0
  %826 = vmatprep.subr.bf16.mxu0 0
  %827 = vmatpush1.bf16.msra.mxu0 0
  %828 = vmatprep.subr.bf16.mxu0 0
  %829 = vmatpush1.bf16.msra.mxu0 0
  %830 = vmatprep.subr.bf16.mxu0 0
  %831 = vmatpush1.bf16.msra.mxu0 0
  %832 = vmatprep.subr.bf16.mxu0 0
  %833 = vmatpush1.bf16.msra.mxu0 0
  %834 = vmatprep.subr.bf16.mxu0 0
  %835 = vmatpush1.bf16.msra.mxu0 0
  %836 = vmatprep.subr.bf16.mxu0 0
  %837 = vmatpush1.bf16.msra.mxu0 0
  %838 = vmatprep.subr.bf16.mxu0 0
  %839 = vmatpush1.bf16.msra.mxu0 0
  %840 = vmatprep.subr.bf16.mxu0 0
  %841 = vmatpush1.bf16.msra.mxu0 0
  %842 = vmatprep.subr.bf16.mxu0 0
  %843 = vmatpush1.bf16.msra.mxu0 0
  %844 = vmatprep.subr.bf16.mxu0 0
  %845 = vmatpush1.bf16.msra.mxu0 0
  %846 = vmatprep.subr.bf16.mxu0 0
  %847 = vmatpush1.bf16.msra.mxu0 0
  %848 = vmatprep.mubr.bf16.mxu0 0
  %849 = vmatmul.mubr.bf16.gmra.mrb[0].mxu0 %v814
  %v850 = vpop.f32.mrb[0].mxu0
  %v851 = vadd.f32 %v811, %v850
  %v852 = vpop.f32.mrb[0].mxu0
  %v853 = vpop.f32.mrb[0].mxu0
  %v854 = vpop.f32.mrb[0].mxu0
  %855 = vdwg.mxu0
  %v856 = vxor.u32 %v851, 2147483648
  %v857 = vmul.f32 %v856, 1.442695
  %v858 = vpow.pop %v857
  %v859 = vadd.f32 %v858, 1.0
  %v860 = vrcp.pop %v859
  %v861 = vmul.f32 1.0, %v860
  %v862 = vtanh.pop %v851
  %v863 = vmul.f32 %v861, %v798
  %865 = vrot.lane.b32.xlu0 %v862, 64
  %v866 = vpop.permute.xlu0 %865
  %v868 = vmul.f32 %v861, %v866
  %870 = vrot.lane.b32.xlu0 %v868, 32
  %v871 = vpop.permute.xlu0 %870
  %v873 = vadd.f32 %v863, %v871
  %v874 = vtanh.pop %v873
  %876 = vrot.lane.b32.xlu0 %v874, 64
  %v877 = vpop.permute.xlu0 %876
  %v879 = vmul.f32 %v861, %v877
  %v880 = vpack.c.bf16 %v879, %v879
  %882 = vrot.lane.b32.xlu0 %v880, 32
  %v883 = vpop.permute.xlu0 %882
  %v884 = vrot.slane %v561, 5
  %v885 = vrot.slane %v562, 4
  %v886 = vsel %vm487, %v885, %v884
  %v889 = vsel %vm119, %v883, 0
  %891 = vmatprep.subr.bf16.mxu0 0
  %892 = vmatpush1.bf16.msra.mxu0 %v480
  %893 = vmatprep.subr.bf16.mxu0 0
  %894 = vmatpush1.bf16.msra.mxu0 %v481
  %895 = vmatprep.subr.bf16.mxu0 0
  %896 = vmatpush1.bf16.msra.mxu0 0
  %897 = vmatprep.subr.bf16.mxu0 0
  %898 = vmatpush1.bf16.msra.mxu0 0
  %899 = vmatprep.subr.bf16.mxu0 0
  %900 = vmatpush1.bf16.msra.mxu0 0
  %901 = vmatprep.subr.bf16.mxu0 0
  %902 = vmatpush1.bf16.msra.mxu0 0
  %903 = vmatprep.subr.bf16.mxu0 0
  %904 = vmatpush1.bf16.msra.mxu0 0
  %905 = vmatprep.subr.bf16.mxu0 0
  %906 = vmatpush1.bf16.msra.mxu0 0
  %907 = vmatprep.subr.bf16.mxu0 0
  %908 = vmatpush1.bf16.msra.mxu0 0
  %909 = vmatprep.subr.bf16.mxu0 0
  %910 = vmatpush1.bf16.msra.mxu0 0
  %911 = vmatprep.subr.bf16.mxu0 0
  %912 = vmatpush1.bf16.msra.mxu0 0
  %913 = vmatprep.subr.bf16.mxu0 0
  %914 = vmatpush1.bf16.msra.mxu0 0
  %915 = vmatprep.subr.bf16.mxu0 0
  %916 = vmatpush1.bf16.msra.mxu0 0
  %917 = vmatprep.subr.bf16.mxu0 0
  %918 = vmatpush1.bf16.msra.mxu0 0
  %919 = vmatprep.subr.bf16.mxu0 0
  %920 = vmatpush1.bf16.msra.mxu0 0
  %921 = vmatprep.subr.bf16.mxu0 0
  %922 = vmatpush1.bf16.msra.mxu0 0
  %923 = vmatprep.mubr.bf16.mxu0 0
  %924 = vmatmul.mubr.bf16.gmra.mrb[0].mxu0 %v889
  %v925 = vpop.f32.mrb[0].mxu0
  %v926 = vadd.f32 %v886, %v925
  %v927 = vpop.f32.mrb[0].mxu0
  %v928 = vpop.f32.mrb[0].mxu0
  %v929 = vpop.f32.mrb[0].mxu0
  %930 = vdwg.mxu0
  %v931 = vxor.u32 %v926, 2147483648
  %v932 = vmul.f32 %v931, 1.442695
  %v933 = vpow.pop %v932
  %v934 = vadd.f32 %v933, 1.0
  %v935 = vrcp.pop %v934
  %v936 = vmul.f32 1.0, %v935
  %v937 = vtanh.pop %v926
  %v938 = vmul.f32 %v936, %v873
  %940 = vrot.lane.b32.xlu0 %v937, 64
  %v941 = vpop.permute.xlu0 %940
  %v943 = vmul.f32 %v936, %v941
  %945 = vrot.lane.b32.xlu0 %v943, 32
  %v946 = vpop.permute.xlu0 %945
  %v948 = vadd.f32 %v938, %v946
  %v949 = vtanh.pop %v948
  %951 = vrot.lane.b32.xlu0 %v949, 64
  %v952 = vpop.permute.xlu0 %951
  %v954 = vmul.f32 %v936, %v952
  %v955 = vpack.c.bf16 %v954, %v954
  %957 = vrot.lane.b32.xlu0 %v955, 32
  %v958 = vpop.permute.xlu0 %957
  %v959 = vrot.slane %v643, 6
  %v960 = vrot.slane %v644, 5
  %v961 = vsel %vm487, %v960, %v959
  %v964 = vsel %vm119, %v958, 0
  %966 = vmatprep.subr.bf16.mxu0 0
  %967 = vmatpush1.bf16.msra.mxu0 %v480
  %968 = vmatprep.subr.bf16.mxu0 0
  %969 = vmatpush1.bf16.msra.mxu0 %v481
  %970 = vmatprep.subr.bf16.mxu0 0
  %971 = vmatpush1.bf16.msra.mxu0 0
  %972 = vmatprep.subr.bf16.mxu0 0
  %973 = vmatpush1.bf16.msra.mxu0 0
  %974 = vmatprep.subr.bf16.mxu0 0
  %975 = vmatpush1.bf16.msra.mxu0 0
  %976 = vmatprep.subr.bf16.mxu0 0
  %977 = vmatpush1.bf16.msra.mxu0 0
  %978 = vmatprep.subr.bf16.mxu0 0
  %979 = vmatpush1.bf16.msra.mxu0 0
  %980 = vmatprep.subr.bf16.mxu0 0
  %981 = vmatpush1.bf16.msra.mxu0 0
  %982 = vmatprep.subr.bf16.mxu0 0
  %983 = vmatpush1.bf16.msra.mxu0 0
  %984 = vmatprep.subr.bf16.mxu0 0
  %985 = vmatpush1.bf16.msra.mxu0 0
  %986 = vmatprep.subr.bf16.mxu0 0
  %987 = vmatpush1.bf16.msra.mxu0 0
  %988 = vmatprep.subr.bf16.mxu0 0
  %989 = vmatpush1.bf16.msra.mxu0 0
  %990 = vmatprep.subr.bf16.mxu0 0
  %991 = vmatpush1.bf16.msra.mxu0 0
  %992 = vmatprep.subr.bf16.mxu0 0
  %993 = vmatpush1.bf16.msra.mxu0 0
  %994 = vmatprep.subr.bf16.mxu0 0
  %995 = vmatpush1.bf16.msra.mxu0 0
  %996 = vmatprep.subr.bf16.mxu0 0
  %997 = vmatpush1.bf16.msra.mxu0 0
  %998 = vmatprep.mubr.bf16.mxu0 0
  %999 = vmatmul.mubr.bf16.gmra.mrb[0].mxu0 %v964
  %v1000 = vpop.f32.mrb[0].mxu0
  %v1001 = vadd.f32 %v961, %v1000
  %v1002 = vpop.f32.mrb[0].mxu0
  %v1003 = vpop.f32.mrb[0].mxu0
  %v1004 = vpop.f32.mrb[0].mxu0
  %1005 = vdwg.mxu0
  %v1006 = vxor.u32 %v1001, 2147483648
  %v1007 = vmul.f32 %v1006, 1.442695
  %v1008 = vpow.pop %v1007
  %v1009 = vadd.f32 %v1008, 1.0
  %v1010 = vrcp.pop %v1009
  %v1011 = vmul.f32 1.0, %v1010
  %v1012 = vtanh.pop %v1001
  %v1013 = vmul.f32 %v1011, %v948
  %1015 = vrot.lane.b32.xlu0 %v1012, 64
  %v1016 = vpop.permute.xlu0 %1015
  %v1018 = vmul.f32 %v1011, %v1016
  %1020 = vrot.lane.b32.xlu0 %v1018, 32
  %v1021 = vpop.permute.xlu0 %1020
  %v1023 = vadd.f32 %v1013, %v1021
  %v1024 = vtanh.pop %v1023
  %1026 = vrot.lane.b32.xlu0 %v1024, 64
  %v1027 = vpop.permute.xlu0 %1026
  %v1029 = vmul.f32 %v1011, %v1027
  %v1030 = vpack.c.bf16 %v1029, %v1029
  %1032 = vrot.lane.b32.xlu0 %v1030, 32
  %v1033 = vpop.permute.xlu0 %1032
  %v1034 = vrot.slane %v726, 7
  %v1035 = vrot.slane %v727, 6
  %v1036 = vsel %vm487, %v1035, %v1034
  %v1039 = vsel %vm119, %v1033, 0
  %1041 = vmatprep.subr.bf16.mxu0 0
  %1042 = vmatpush1.bf16.msra.mxu0 %v480
  %1043 = vmatprep.subr.bf16.mxu0 0
  %1044 = vmatpush1.bf16.msra.mxu0 %v481
  %1045 = vmatprep.subr.bf16.mxu0 0
  %1046 = vmatpush1.bf16.msra.mxu0 0
  %1047 = vmatprep.subr.bf16.mxu0 0
  %1048 = vmatpush1.bf16.msra.mxu0 0
  %1049 = vmatprep.subr.bf16.mxu0 0
  %1050 = vmatpush1.bf16.msra.mxu0 0
  %1051 = vmatprep.subr.bf16.mxu0 0
  %1052 = vmatpush1.bf16.msra.mxu0 0
  %1053 = vmatprep.subr.bf16.mxu0 0
  %1054 = vmatpush1.bf16.msra.mxu0 0
  %1055 = vmatprep.subr.bf16.mxu0 0
  %1056 = vmatpush1.bf16.msra.mxu0 0
  %1057 = vmatprep.subr.bf16.mxu0 0
  %1058 = vmatpush1.bf16.msra.mxu0 0
  %1059 = vmatprep.subr.bf16.mxu0 0
  %1060 = vmatpush1.bf16.msra.mxu0 0
  %1061 = vmatprep.subr.bf16.mxu0 0
  %1062 = vmatpush1.bf16.msra.mxu0 0
  %1063 = vmatprep.subr.bf16.mxu0 0
  %1064 = vmatpush1.bf16.msra.mxu0 0
  %1065 = vmatprep.subr.bf16.mxu0 0
  %1066 = vmatpush1.bf16.msra.mxu0 0
  %1067 = vmatprep.subr.bf16.mxu0 0
  %1068 = vmatpush1.bf16.msra.mxu0 0
  %1069 = vmatprep.subr.bf16.mxu0 0
  %1070 = vmatpush1.bf16.msra.mxu0 0
  %1071 = vmatprep.subr.bf16.mxu0 0
  %1072 = vmatpush1.bf16.msra.mxu0 0
  %1073 = vmatprep.mubr.bf16.mxu0 0
  %1074 = vmatmul.mubr.bf16.gmra.mrb[0].mxu0 %v1039
  %v1075 = vpop.f32.mrb[0].mxu0
  %v1076 = vadd.f32 %v1036, %v1075
  %v1077 = vpop.f32.mrb[0].mxu0
  %v1078 = vpop.f32.mrb[0].mxu0
  %v1079 = vpop.f32.mrb[0].mxu0
  %1080 = vdwg.mxu0
  %v1081 = vxor.u32 %v1076, 2147483648
  %v1082 = vmul.f32 %v1081, 1.442695
  %v1083 = vpow.pop %v1082
  %v1084 = vadd.f32 %v1083, 1.0
  %v1085 = vrcp.pop %v1084
  %v1086 = vmul.f32 1.0, %v1085
  %v1087 = vtanh.pop %v1076
  %v1088 = vmul.f32 %v1086, %v1023
  %1090 = vrot.lane.b32.xlu0 %v1087, 64
  %v1091 = vpop.permute.xlu0 %1090
  %v1093 = vmul.f32 %v1086, %v1091
  %1095 = vrot.lane.b32.xlu0 %v1093, 32
  %v1096 = vpop.permute.xlu0 %1095
  %v1098 = vadd.f32 %v1088, %v1096
  %v1099 = vtanh.pop %v1098
  %1101 = vrot.lane.b32.xlu0 %v1099, 64
  %v1102 = vpop.permute.xlu0 %1101
  %v1104 = vmul.f32 %v1086, %v1102
  %v1107 = vunpack.c.l.s4 1966171168
  %v1108 = vunpack.c.0.s8 %v1107
  %v1109 = vlaneseq
  %v1110 = vshrl.u32 %v1109, 7
  %v1111 = vsub.s32 %v1108, %v1110
  %v1112 = vrot.slane %v556, %v1111
  %v1113 = vcombine.high %v1112, %v1112
  %v1115 = vunpack.c.l.s4 1966171168
  %v1116 = vunpack.c.0.s8 %v1115
  %v1117 = vlaneseq
  %v1118 = vshrl.u32 %v1117, 7
  %v1119 = vsub.s32 %v1116, %v1118
  %v1120 = vrot.slane %v1112, %v1119
  %v1122 = vunpack.c.l.s4 1966171168
  %v1123 = vunpack.c.0.s8 %v1122
  %v1124 = vlaneseq
  %v1125 = vshrl.u32 %v1124, 7
  %v1126 = vsub.s32 %v1123, %v1125
  %v1127 = vrot.slane %v1113, %v1126
  %v1132 = vunpack.c.l.s4 1966171168
  %v1133 = vunpack.c.0.s8 %v1132
  %v1134 = vlaneseq
  %v1135 = vshrl.u32 %v1134, 7
  %v1136 = vsub.s32 %v1133, %v1135
  %v1137 = vrot.slane %v638, %v1136
  %v1138 = vcombine.high %v1137, %v1137
  %v1140 = vunpack.c.l.s4 1966171168
  %v1141 = vunpack.c.0.s8 %v1140
  %v1142 = vlaneseq
  %v1143 = vshrl.u32 %v1142, 7
  %v1144 = vsub.s32 %v1141, %v1143
  %v1145 = vrot.slane %v1137, %v1144
  %v1147 = vunpack.c.l.s4 1966171168
  %v1148 = vunpack.c.0.s8 %v1147
  %v1149 = vlaneseq
  %v1150 = vshrl.u32 %v1149, 7
  %v1151 = vsub.s32 %v1148, %v1150
  %v1152 = vrot.slane %v1138, %v1151
  %v1155 = vunpack.c.l.s4 1966171168
  %v1156 = vunpack.c.0.s8 %v1155
  %v1157 = vlaneseq
  %v1158 = vshrl.u32 %v1157, 7
  %v1159 = vsub.s32 %v1156, %v1158
  %v1160 = vrot.slane %v721, %v1159
  %v1161 = vcombine.high %v1160, %v1160
  %v1163 = vunpack.c.l.s4 1966171168
  %v1164 = vunpack.c.0.s8 %v1163
  %v1165 = vlaneseq
  %v1166 = vshrl.u32 %v1165, 7
  %v1167 = vsub.s32 %v1164, %v1166
  %v1168 = vrot.slane %v1160, %v1167
  %v1170 = vunpack.c.l.s4 1966171168
  %v1171 = vunpack.c.0.s8 %v1170
  %v1172 = vlaneseq
  %v1173 = vshrl.u32 %v1172, 7
  %v1174 = vsub.s32 %v1171, %v1173
  %v1175 = vrot.slane %v1161, %v1174
  %v1178 = vunpack.c.l.s4 1966171168
  %v1179 = vunpack.c.0.s8 %v1178
  %v1180 = vlaneseq
  %v1181 = vshrl.u32 %v1180, 7
  %v1182 = vsub.s32 %v1179, %v1181
  %v1183 = vrot.slane %v804, %v1182
  %v1184 = vcombine.high %v1183, %v1183
  %v1186 = vunpack.c.l.s4 1966171168
  %v1187 = vunpack.c.0.s8 %v1186
  %v1188 = vlaneseq
  %v1189 = vshrl.u32 %v1188, 7
  %v1190 = vsub.s32 %v1187, %v1189
  %v1191 = vrot.slane %v1183, %v1190
  %v1193 = vunpack.c.l.s4 1966171168
  %v1194 = vunpack.c.0.s8 %v1193
  %v1195 = vlaneseq
  %v1196 = vshrl.u32 %v1195, 7
  %v1197 = vsub.s32 %v1194, %v1196
  %v1198 = vrot.slane %v1184, %v1197
  %v1201 = vunpack.c.l.s4 1966171168
  %v1202 = vunpack.c.0.s8 %v1201
  %v1203 = vlaneseq
  %v1204 = vshrl.u32 %v1203, 7
  %v1205 = vsub.s32 %v1202, %v1204
  %v1206 = vrot.slane %v879, %v1205
  %v1207 = vcombine.high %v1206, %v1206
  %v1209 = vunpack.c.l.s4 1966171168
  %v1210 = vunpack.c.0.s8 %v1209
  %v1211 = vlaneseq
  %v1212 = vshrl.u32 %v1211, 7
  %v1213 = vsub.s32 %v1210, %v1212
  %v1214 = vrot.slane %v1206, %v1213
  %v1216 = vunpack.c.l.s4 1966171168
  %v1217 = vunpack.c.0.s8 %v1216
  %v1218 = vlaneseq
  %v1219 = vshrl.u32 %v1218, 7
  %v1220 = vsub.s32 %v1217, %v1219
  %v1221 = vrot.slane %v1207, %v1220
  %v1224 = vunpack.c.l.s4 1966171168
  %v1225 = vunpack.c.0.s8 %v1224
  %v1226 = vlaneseq
  %v1227 = vshrl.u32 %v1226, 7
  %v1228 = vsub.s32 %v1225, %v1227
  %v1229 = vrot.slane %v954, %v1228
  %v1230 = vcombine.high %v1229, %v1229
  %v1232 = vunpack.c.l.s4 1966171168
  %v1233 = vunpack.c.0.s8 %v1232
  %v1234 = vlaneseq
  %v1235 = vshrl.u32 %v1234, 7
  %v1236 = vsub.s32 %v1233, %v1235
  %v1237 = vrot.slane %v1229, %v1236
  %v1239 = vunpack.c.l.s4 1966171168
  %v1240 = vunpack.c.0.s8 %v1239
  %v1241 = vlaneseq
  %v1242 = vshrl.u32 %v1241, 7
  %v1243 = vsub.s32 %v1240, %v1242
  %v1244 = vrot.slane %v1230, %v1243
  %v1247 = vunpack.c.l.s4 1966171168
  %v1248 = vunpack.c.0.s8 %v1247
  %v1249 = vlaneseq
  %v1250 = vshrl.u32 %v1249, 7
  %v1251 = vsub.s32 %v1248, %v1250
  %v1252 = vrot.slane %v1029, %v1251
  %v1253 = vcombine.high %v1252, %v1252
  %v1255 = vunpack.c.l.s4 1966171168
  %v1256 = vunpack.c.0.s8 %v1255
  %v1257 = vlaneseq
  %v1258 = vshrl.u32 %v1257, 7
  %v1259 = vsub.s32 %v1256, %v1258
  %v1260 = vrot.slane %v1252, %v1259
  %v1262 = vunpack.c.l.s4 1966171168
  %v1263 = vunpack.c.0.s8 %v1262
  %v1264 = vlaneseq
  %v1265 = vshrl.u32 %v1264, 7
  %v1266 = vsub.s32 %v1263, %v1265
  %v1267 = vrot.slane %v1253, %v1266
  %v1270 = vunpack.c.l.s4 1966171168
  %v1271 = vunpack.c.0.s8 %v1270
  %v1272 = vlaneseq
  %v1273 = vshrl.u32 %v1272, 7
  %v1274 = vsub.s32 %v1271, %v1273
  %v1275 = vrot.slane %v1104, %v1274
  %v1276 = vcombine.high %v1275, %v1275
  %v1278 = vunpack.c.l.s4 1966171168
  %v1279 = vunpack.c.0.s8 %v1278
  %v1280 = vlaneseq
  %v1281 = vshrl.u32 %v1280, 7
  %v1282 = vsub.s32 %v1279, %v1281
  %v1283 = vrot.slane %v1275, %v1282
  %v1285 = vunpack.c.l.s4 1966171168
  %v1286 = vunpack.c.0.s8 %v1285
  %v1287 = vlaneseq
  %v1288 = vshrl.u32 %v1287, 7
  %v1289 = vsub.s32 %v1286, %v1288
  %v1290 = vrot.slane %v1276, %v1289
  %v1291 = vlaneseq
  %v1292 = vshrl.u32 %v1291, 7
  %v1293 = vsub.s32 0, %v1292
  %v1294 = vrot.slane %v1145, %v1293
  %v1295 = vlaneseq
  %v1296 = vshrl.u32 %v1295, 7
  %v1297 = vsub.s32 0, %v1296
  %v1298 = vrot.slane %v1152, %v1297
  %v1301 = vlaneseq
  %v1302 = vshrl.u32 %v1301, 7
  %v1303 = vsub.s32 0, %v1302
  %v1304 = vrot.slane %v1168, %v1303
  %v1305 = vlaneseq
  %v1306 = vshrl.u32 %v1305, 7
  %v1307 = vsub.s32 0, %v1306
  %v1308 = vrot.slane %v1175, %v1307
  %v1311 = vlaneseq
  %v1312 = vshrl.u32 %v1311, 7
  %v1313 = vsub.s32 0, %v1312
  %v1314 = vrot.slane %v1191, %v1313
  %v1315 = vlaneseq
  %v1316 = vshrl.u32 %v1315, 7
  %v1317 = vsub.s32 0, %v1316
  %v1318 = vrot.slane %v1198, %v1317
  %v1321 = vlaneseq
  %v1322 = vshrl.u32 %v1321, 7
  %v1323 = vsub.s32 0, %v1322
  %v1324 = vrot.slane %v1214, %v1323
  %v1325 = vlaneseq
  %v1326 = vshrl.u32 %v1325, 7
  %v1327 = vsub.s32 0, %v1326
  %v1328 = vrot.slane %v1221, %v1327
  %v1331 = vlaneseq
  %v1332 = vshrl.u32 %v1331, 7
  %v1333 = vsub.s32 0, %v1332
  %v1334 = vrot.slane %v1237, %v1333
  %v1335 = vlaneseq
  %v1336 = vshrl.u32 %v1335, 7
  %v1337 = vsub.s32 0, %v1336
  %v1338 = vrot.slane %v1244, %v1337
  %v1341 = vlaneseq
  %v1342 = vshrl.u32 %v1341, 7
  %v1343 = vsub.s32 0, %v1342
  %v1344 = vrot.slane %v1260, %v1343
  %v1345 = vlaneseq
  %v1346 = vshrl.u32 %v1345, 7
  %v1347 = vsub.s32 0, %v1346
  %v1348 = vrot.slane %v1267, %v1347
  %v1351 = vlaneseq
  %v1352 = vshrl.u32 %v1351, 7
  %v1353 = vsub.s32 0, %v1352
  %v1354 = vrot.slane %v1283, %v1353
  %v1355 = vlaneseq
  %v1356 = vshrl.u32 %v1355, 7
  %v1357 = vsub.s32 0, %v1356
  %v1358 = vrot.slane %v1290, %v1357
  %vm1361 = vcmask 1040384
  %v1362 = vsel %vm1361, %v1120, %v1294
  %v1363 = vsel %vm1361, %v1127, %v1298
  %vm1364 = vcmask 1041408
  %v1365 = vsel %vm1364, %v1362, %v1304
  %v1366 = vsel %vm1364, %v1363, %v1308
  %vm1367 = vcmask 1042432
  %v1368 = vsel %vm1367, %v1365, %v1314
  %v1369 = vsel %vm1367, %v1366, %v1318
  %vm1370 = vcmask 1043456
  %v1371 = vsel %vm1370, %v1368, %v1324
  %v1372 = vsel %vm1370, %v1369, %v1328
  %vm1373 = vcmask 1044480
  %v1374 = vsel %vm1373, %v1371, %v1334
  %v1375 = vsel %vm1373, %v1372, %v1338
  %vm1376 = vcmask 1045504
  %v1377 = vsel %vm1376, %v1374, %v1344
  %v1378 = vsel %vm1376, %v1375, %v1348
  %vm1379 = vcmask 1046528
  %v1380 = vsel %vm1379, %v1377, %v1354
  %v1381 = vsel %vm1379, %v1378, %v1358
  %v1384 = vlaneseq
  %v1385 = vshrl.u32 %v1384, 7
  %v1386 = vsub.s32 0, %v1385
  %v1387 = vrot.slane %v1120, %v1386
  %v1388 = vlaneseq
  %v1389 = vshrl.u32 %v1388, 7
  %v1390 = vsub.s32 0, %v1389
  %v1391 = vrot.slane %v1127, %v1390
  %v1394 = vsel %vm1361, %v1283, %v1344
  %v1395 = vsel %vm1361, %v1290, %v1348
  %v1396 = vsel %vm1364, %v1394, %v1334
  %v1397 = vsel %vm1364, %v1395, %v1338
  %v1398 = vsel %vm1367, %v1396, %v1324
  %v1399 = vsel %vm1367, %v1397, %v1328
  %v1400 = vsel %vm1370, %v1398, %v1314
  %v1401 = vsel %vm1370, %v1399, %v1318
  %v1402 = vsel %vm1373, %v1400, %v1304
  %v1403 = vsel %vm1373, %v1401, %v1308
  %v1404 = vsel %vm1376, %v1402, %v1294
  %v1405 = vsel %vm1376, %v1403, %v1298
  %v1406 = vsel %vm1379, %v1404, %v1387
  %v1407 = vsel %vm1379, %v1405, %v1391
  %1410 = vrot.lane.b32.xlu0 %v1380, 32
  %v1411 = vpop.permute.xlu0 %1410
  %1412 = vrot.lane.b32.xlu0 %v1381, 32
  %v1413 = vpop.permute.xlu0 %1412
  %1418 = vrot.lane.b32.xlu0 %v1406, 32
  %v1419 = vpop.permute.xlu0 %1418
  %1420 = vrot.lane.b32.xlu0 %v1407, 32
  %v1421 = vpop.permute.xlu0 %1420
  %v1424 = vsel %vm180, %v1411, %v1419
  %v1425 = vsel %vm180, %v1413, %v1421
  %v1426 = vpack.c.bf16 %v1425, %v1424
  %v1427 = vld [vmem:[%s12] sm:$0xf]
  %v1428 = vld [vmem:[%s12 + $0x4] sm:$0xf]
  %v1429 = vld [vmem:[%s12 + $0x8] sm:$0xf]
  %v1430 = vld [vmem:[%s12 + $0xc] sm:$0xf]
  %v1431 = vld [vmem:[%s13] sm:$0x1]
  %v1433 = vlaneseq
  %v1434 = vshrl.u32 %v1433, 7
  %v1435 = vsub.s32 0, %v1434
  %v1436 = vrot.slane %v1431, %v1435
  %v1442 = vunpack.c.l.b16 %v1427
  %v1443 = vunpack.c.l.b16 %v1428
  %v1444 = vunpack.c.l.b16 %v1429
  %v1445 = vunpack.c.l.b16 %v1430
  %v1446 = vpack.c.b16 %v1443, %v1442
  %v1447 = vpack.c.b16 %v1445, %v1444
  %v1451 = vsel %vm119, %v1426, 0
  %1453 = vmatprep.subr.bf16.mxu0 0
  %1454 = vmatpush1.bf16.msra.mxu0 %v1446
  %1455 = vmatprep.subr.bf16.mxu0 0
  %1456 = vmatpush1.bf16.msra.mxu0 %v1447
  %1457 = vmatprep.subr.bf16.mxu0 0
  %1458 = vmatpush1.bf16.msra.mxu0 0
  %1459 = vmatprep.subr.bf16.mxu0 0
  %1460 = vmatpush1.bf16.msra.mxu0 0
  %1461 = vmatprep.subr.bf16.mxu0 0
  %1462 = vmatpush1.bf16.msra.mxu0 0
  %1463 = vmatprep.subr.bf16.mxu0 0
  %1464 = vmatpush1.bf16.msra.mxu0 0
  %1465 = vmatprep.subr.bf16.mxu0 0
  %1466 = vmatpush1.bf16.msra.mxu0 0
  %1467 = vmatprep.subr.bf16.mxu0 0
  %1468 = vmatpush1.bf16.msra.mxu0 0
  %1469 = vmatprep.subr.bf16.mxu0 0
  %1470 = vmatpush1.bf16.msra.mxu0 0
  %1471 = vmatprep.subr.bf16.mxu0 0
  %1472 = vmatpush1.bf16.msra.mxu0 0
  %1473 = vmatprep.subr.bf16.mxu0 0
  %1474 = vmatpush1.bf16.msra.mxu0 0
  %1475 = vmatprep.subr.bf16.mxu0 0
  %1476 = vmatpush1.bf16.msra.mxu0 0
  %1477 = vmatprep.subr.bf16.mxu0 0
  %1478 = vmatpush1.bf16.msra.mxu0 0
  %1479 = vmatprep.subr.bf16.mxu0 0
  %1480 = vmatpush1.bf16.msra.mxu0 0
  %1481 = vmatprep.subr.bf16.mxu0 0
  %1482 = vmatpush1.bf16.msra.mxu0 0
  %1483 = vmatprep.subr.bf16.mxu0 0
  %1484 = vmatpush1.bf16.msra.mxu0 0
  %1485 = vmatprep.mubr.bf16.mxu0 0
  %1486 = vmatmul.mubr.bf16.gmra.mrb[0].mxu0 %v1451
  %v1487 = vpop.f32.mrb[0].mxu0
  %v1488 = vadd.f32 %v1436, %v1487
  %v1489 = vpop.f32.mrb[0].mxu0
  %v1490 = vpop.f32.mrb[0].mxu0
  %v1491 = vadd.f32 %v1436, %v1490
  %v1492 = vpop.f32.mrb[0].mxu0
  %1493 = vdwg.mxu0
  %v1494 = vmax.f32 %v1488, 0.0
  %v1495 = vmax.f32 %v1491, 0.0
  %v1496 = vpack.c.bf16 %v1495, %v1494
  %v1497 = vld [vmem:[%s14] sm:$0xf]
  %v1498 = vld [vmem:[%s14 + $0x4] sm:$0xf]
  %v1499 = vld [vmem:[%s15] sm:$0x1]
  %v1501 = vlaneseq
  %v1502 = vshrl.u32 %v1501, 7
  %v1503 = vsub.s32 0, %v1502
  %v1504 = vrot.slane %v1499, %v1503
  %v1508 = vunpack.c.l.b16 %v1497
  %v1509 = vunpack.c.l.b16 %v1498
  %v1510 = vpack.c.b16 %v1509, %v1508
  %v1513 = vsel %vm180, %v1496, 0
  %1515 = vmatprep.subr.bf16.mxu0 0
  %1516 = vmatpush1.bf16.msra.mxu0 %v1510
  %1517 = vmatprep.subr.bf16.mxu0 0
  %1518 = vmatpush1.bf16.msra.mxu0 0
  %1519 = vmatprep.subr.bf16.mxu0 0
  %1520 = vmatpush1.bf16.msra.mxu0 0
  %1521 = vmatprep.subr.bf16.mxu0 0
  %1522 = vmatpush1.bf16.msra.mxu0 0
  %1523 = vmatprep.subr.bf16.mxu0 0
  %1524 = vmatpush1.bf16.msra.mxu0 0
  %1525 = vmatprep.subr.bf16.mxu0 0
  %1526 = vmatpush1.bf16.msra.mxu0 0
  %1527 = vmatprep.subr.bf16.mxu0 0
  %1528 = vmatpush1.bf16.msra.mxu0 0
  %1529 = vmatprep.subr.bf16.mxu0 0
  %1530 = vmatpush1.bf16.msra.mxu0 0
  %1531 = vmatprep.subr.bf16.mxu0 0
  %1532 = vmatpush1.bf16.msra.mxu0 0
  %1533 = vmatprep.subr.bf16.mxu0 0
  %1534 = vmatpush1.bf16.msra.mxu0 0
  %1535 = vmatprep.subr.bf16.mxu0 0
  %1536 = vmatpush1.bf16.msra.mxu0 0
  %1537 = vmatprep.subr.bf16.mxu0 0
  %1538 = vmatpush1.bf16.msra.mxu0 0
  %1539 = vmatprep.subr.bf16.mxu0 0
  %1540 = vmatpush1.bf16.msra.mxu0 0
  %1541 = vmatprep.subr.bf16.mxu0 0
  %1542 = vmatpush1.bf16.msra.mxu0 0
  %1543 = vmatprep.subr.bf16.mxu0 0
  %1544 = vmatpush1.bf16.msra.mxu0 0
  %1545 = vmatprep.subr.bf16.mxu0 0
  %1546 = vmatpush1.bf16.msra.mxu0 0
  %1547 = vmatprep.mubr.bf16.mxu0 0
  %1548 = vmatmul.mubr.bf16.gmra.mrb[0].mxu0 %v1513
  %v1549 = vpop.f32.mrb[0].mxu0
  %v1550 = vadd.f32 %v1504, %v1549
  %v1551 = vpop.f32.mrb[0].mxu0
  %v1552 = vpop.f32.mrb[0].mxu0
  %v1553 = vadd.f32 %v1504, %v1552
  %v1554 = vpop.f32.mrb[0].mxu0
  %1555 = vdwg.mxu0
  %v1556 = vmax.f32 %v1550, 0.0
  %v1557 = vmax.f32 %v1553, 0.0
  %v1558 = vpack.c.bf16 %v1557, %v1556
  %v1559 = vld [vmem:[%s16] sm:$0xf]
  %v1560 = vld [vmem:[%s16 + $0x4] sm:$0xf]
  %v1561 = vld [vmem:[#allocation2] sm:$0x1]
  %v1563 = vlaneseq
  %v1564 = vshrl.u32 %v1563, 7
  %v1565 = vsub.s32 0, %v1564
  %v1566 = vrot.slane %v1561, %v1565
  %v1570 = vunpack.c.l.b16 %v1559
  %v1571 = vunpack.c.l.b16 %v1560
  %v1572 = vpack.c.b16 %v1571, %v1570
  %v1575 = vsel %vm180, %v1558, 0
  %1577 = vmatprep.subr.bf16.mxu0 0
  %1578 = vmatpush1.bf16.msra.mxu0 %v1572
  %1579 = vmatprep.subr.bf16.mxu0 0
  %1580 = vmatpush1.bf16.msra.mxu0 0
  %1581 = vmatprep.subr.bf16.mxu0 0
  %1582 = vmatpush1.bf16.msra.mxu0 0
  %1583 = vmatprep.subr.bf16.mxu0 0
  %1584 = vmatpush1.bf16.msra.mxu0 0
  %1585 = vmatprep.subr.bf16.mxu0 0
  %1586 = vmatpush1.bf16.msra.mxu0 0
  %1587 = vmatprep.subr.bf16.mxu0 0
  %1588 = vmatpush1.bf16.msra.mxu0 0
  %1589 = vmatprep.subr.bf16.mxu0 0
  %1590 = vmatpush1.bf16.msra.mxu0 0
  %1591 = vmatprep.subr.bf16.mxu0 0
  %1592 = vmatpush1.bf16.msra.mxu0 0
  %1593 = vmatprep.subr.bf16.mxu0 0
  %1594 = vmatpush1.bf16.msra.mxu0 0
  %1595 = vmatprep.subr.bf16.mxu0 0
  %1596 = vmatpush1.bf16.msra.mxu0 0
  %1597 = vmatprep.subr.bf16.mxu0 0
  %1598 = vmatpush1.bf16.msra.mxu0 0
  %1599 = vmatprep.subr.bf16.mxu0 0
  %1600 = vmatpush1.bf16.msra.mxu0 0
  %1601 = vmatprep.subr.bf16.mxu0 0
  %1602 = vmatpush1.bf16.msra.mxu0 0
  %1603 = vmatprep.subr.bf16.mxu0 0
  %1604 = vmatpush1.bf16.msra.mxu0 0
  %1605 = vmatprep.subr.bf16.mxu0 0
  %1606 = vmatpush1.bf16.msra.mxu0 0
  %1607 = vmatprep.subr.bf16.mxu0 0
  %1608 = vmatpush1.bf16.msra.mxu0 0
  %1609 = vmatprep.mubr.bf16.mxu0 0
  %1610 = vmatmul.mubr.bf16.gmra.mrb[0].mxu0 %v1575
  %v1611 = vpop.f32.mrb[0].mxu0
  %v1612 = vadd.f32 %v1566, %v1611
  %v1613 = vpop.f32.mrb[0].mxu0
  %v1614 = vpop.f32.mrb[0].mxu0
  %v1615 = vadd.f32 %v1566, %v1614
  %v1616 = vpop.f32.mrb[0].mxu0
  %1617 = vdwg.mxu0
  %v1618 = vxor.u32 %v1612, 2147483648
  %v1619 = vxor.u32 %v1615, 2147483648
  %v1620 = vmul.f32 %v1618, 1.442695
  %v1621 = vpow.pop %v1620
  %v1622 = vmul.f32 %v1619, 1.442695
  %v1623 = vpow.pop %v1622
  %v1624 = vadd.f32 %v1621, 1.0
  %v1625 = vadd.f32 %v1623, 1.0
  %v1626 = vrcp.pop %v1624
  %v1627 = vmul.f32 1.0, %v1626
  %v1628 = vrcp.pop %v1625
  %v1629 = vmul.f32 1.0, %v1628
  %v1630 = vlaneseq
  %v1631 = vshrl.u32 %v1630, 7
  %v1632 = vadd.s32 %v1631, 8
  %vm1633 = vcmp.lt.s32.totalorder %v1631, 0
  %v1634 = vsub.s32 0, %v1631
  %v1635 = vsel %vm1633, %v1634, %v1631
  %v1636 = vshrl.u32 %v1635, 3
  %v1637 = vand.u32 %v1635, 7
  %v1638 = vsub.s32 0, %v1637
  %v1639 = vsel %vm1633, %v1638, %v1637
  %vm1640 = vcmp.lt.s32.totalorder %v1632, 0
  %v1641 = vsub.s32 0, %v1632
  %v1642 = vsel %vm1640, %v1641, %v1632
  %v1643 = vshrl.u32 %v1642, 3
  %v1644 = vand.u32 %v1642, 7
  %v1645 = vsub.s32 0, %v1644
  %v1646 = vsel %vm1640, %v1645, %v1644
  %vm1647 = vcmp.ne.s32.totalorder %v1639, 0
  %vm1648 = vcmp.ne.s32.totalorder %v1646, 0
  %vm1649 = vcmp.lt.s32.totalorder %v1639, 0
  %vm1650 = vcmp.lt.s32.totalorder %v1646, 0
  %vm1651 = vmand %vm1649, %vm1647
  %vm1652 = vmand %vm1650, %vm1648
  %v1653 = vadd.s32 %v1639, 8
  %v1654 = vadd.s32 %v1646, 8
  %v1655 = vsel %vm1651, %v1653, %v1639
  %v1656 = vsel %vm1652, %v1654, %v1646
  %v1657 = vadd.s32 %v1655, 4294967295
  %v1658 = vadd.s32 %v1656, 4294967295
  %vm1659 = vcmp.ge.s32.totalorder %v1657, 0
  %vm1660 = vcmp.ge.s32.totalorder %v1658, 0
  %vm1661 = vcmp.lt.s32.totalorder %v1657, 8
  %vm1662 = vcmp.lt.s32.totalorder %v1658, 8
  %vm1663 = vmand %vm1659, %vm1661
  %vm1664 = vmand %vm1660, %vm1662
  %v1665 = vadd.s32 %v1655, 1
  %v1666 = vadd.s32 %v1656, 1
  %vm1667 = vcmp.ge.s32.totalorder %v1665, 0
  %vm1668 = vcmp.ge.s32.totalorder %v1666, 0
  %vm1669 = vcmp.lt.s32.totalorder %v1665, 8
  %vm1670 = vcmp.lt.s32.totalorder %v1666, 8
  %vm1671 = vmand %vm1667, %vm1669
  %vm1672 = vmand %vm1668, %vm1670
  %1674 = vset.pattern.permute.xlu0 0
  %1675 = vperm.xlu0 %1674, %v1627
  %v1676 = vpop.permute.xlu0 %1675
  %1679 = vset.pattern.permute.xlu0 0
  %1680 = vperm.xlu0 %1679, %v1629
  %v1681 = vpop.permute.xlu0 %1680
  %v1683 = vmul.f32 %v158, %v1676
  %v1684 = vmul.f32 %v161, %v1681
  %v1686 = vrot.slane %v1684, 7
  %v1689 = vrot.slane %v1683, 7
  %v1690 = vsel %vm1361, %v1689, %v1686
  %v1693 = vsel %vm1361, %v1686, %v1689
  %v1694 = vsel %vm1663, %v1693, 0.0
  %v1695 = vsel %vm1664, %v1690, 0.0
  %v1696 = vrot.slane %v1683, 1
  %v1697 = vrot.slane %v1684, 1
  %v1698 = vsel %vm1379, %v1696, %v1697
  %v1702 = vsel %vm1379, %v1697, %v1696
  %v1703 = vsel %vm1671, %v1698, 0.0
  %v1704 = vsel %vm1672, %v1702, 0.0
  %1707 = vrot.lane.b32.xlu0 %v1694, 96
  %v1708 = vpop.permute.xlu0 %1707
  %1709 = vrot.lane.b32.xlu0 %v1695, 96
  %v1710 = vpop.permute.xlu0 %1709
  %1713 = vrot.lane.b32.xlu0 %v1683, 112
  %v1714 = vpop.permute.xlu0 %1713
  %1715 = vrot.lane.b32.xlu0 %v1684, 112
  %v1716 = vpop.permute.xlu0 %1715
  %v1719 = vsel %vm180, %v1708, %v1714
  %v1720 = vsel %vm180, %v1710, %v1716
  %v1721 = vsel %vm119, %v1719, %v1703
  %v1722 = vsel %vm119, %v1720, %v1704
  %v1723 = vpack.c.bf16 %v1722, %v1721
  %v1724 = vld [vmem:[%s18] sm:$0xf]
  %v1725 = vld [vmem:[%s18 + $0x4] sm:$0xf]
  %v1726 = vld [vmem:[%s18 + $0x8] sm:$0xf]
  %v1727 = vld [vmem:[%s18 + $0xc] sm:$0xf]
  %v1728 = vld [vmem:[%s18 + $0x10] sm:$0xf]
  %v1729 = vld [vmem:[%s18 + $0x14] sm:$0xf]
  %v1730 = vld [vmem:[%s19] sm:$0x1]
  %v1732 = vlaneseq
  %v1733 = vshrl.u32 %v1732, 7
  %v1734 = vsub.s32 0, %v1733
  %v1735 = vrot.slane %v1730, %v1734
  %v1743 = vunpack.c.l.b16 %v1724
  %v1744 = vunpack.c.l.b16 %v1725
  %v1745 = vunpack.c.l.b16 %v1726
  %v1746 = vunpack.c.l.b16 %v1727
  %v1747 = vunpack.c.l.b16 %v1728
  %v1748 = vunpack.c.l.b16 %v1729
  %v1749 = vpack.c.b16 %v1744, %v1743
  %v1750 = vpack.c.b16 %v1746, %v1745
  %v1751 = vpack.c.b16 %v1748, %v1747
  %vm1755 = vcmask 392192
  %v1757 = vsel %vm1755, %v1723, 0
  %1759 = vmatprep.subr.bf16.mxu0 0
  %1760 = vmatpush1.bf16.msra.mxu0 %v1749
  %1761 = vmatprep.subr.bf16.mxu0 0
  %1762 = vmatpush1.bf16.msra.mxu0 %v1750
  %1763 = vmatprep.subr.bf16.mxu0 0
  %1764 = vmatpush1.bf16.msra.mxu0 %v1751
  %1765 = vmatprep.subr.bf16.mxu0 0
  %1766 = vmatpush1.bf16.msra.mxu0 0
  %1767 = vmatprep.subr.bf16.mxu0 0
  %1768 = vmatpush1.bf16.msra.mxu0 0
  %1769 = vmatprep.subr.bf16.mxu0 0
  %1770 = vmatpush1.bf16.msra.mxu0 0
  %1771 = vmatprep.subr.bf16.mxu0 0
  %1772 = vmatpush1.bf16.msra.mxu0 0
  %1773 = vmatprep.subr.bf16.mxu0 0
  %1774 = vmatpush1.bf16.msra.mxu0 0
  %1775 = vmatprep.subr.bf16.mxu0 0
  %1776 = vmatpush1.bf16.msra.mxu0 0
  %1777 = vmatprep.subr.bf16.mxu0 0
  %1778 = vmatpush1.bf16.msra.mxu0 0
  %1779 = vmatprep.subr.bf16.mxu0 0
  %1780 = vmatpush1.bf16.msra.mxu0 0
  %1781 = vmatprep.subr.bf16.mxu0 0
  %1782 = vmatpush1.bf16.msra.mxu0 0
  %1783 = vmatprep.subr.bf16.mxu0 0
  %1784 = vmatpush1.bf16.msra.mxu0 0
  %1785 = vmatprep.subr.bf16.mxu0 0
  %1786 = vmatpush1.bf16.msra.mxu0 0
  %1787 = vmatprep.subr.bf16.mxu0 0
  %1788 = vmatpush1.bf16.msra.mxu0 0
  %1789 = vmatprep.subr.bf16.mxu0 0
  %1790 = vmatpush1.bf16.msra.mxu0 0
  %1791 = vmatprep.mubr.bf16.mxu0 0
  %1792 = vmatmul.mubr.bf16.gmra.mrb[0].mxu0 %v1757
  %v1793 = vpop.f32.mrb[0].mxu0
  %v1794 = vadd.f32 %v1735, %v1793
  %v1795 = vpop.f32.mrb[0].mxu0
  %v1796 = vpop.f32.mrb[0].mxu0
  %v1797 = vadd.f32 %v1735, %v1796
  %v1798 = vpop.f32.mrb[0].mxu0
  %1799 = vdwg.mxu0
  %v1800 = vmax.f32 %v1794, 0.0
  %v1801 = vmax.f32 %v1797, 0.0
  %v1802 = vsel %vm180, %v1800, -inf
  %v1803 = vrot.slane %v1802, 4
  %v1804 = vmax.f32 %v1802, %v1803
  %v1805 = vrot.slane %v1804, 2
  %v1806 = vmax.f32 %v1804, %v1805
  %v1807 = vrot.slane %v1806, 1
  %v1808 = vmax.f32 %v1806, %v1807
  %v1809 = vsel %vm180, %v1801, -inf
  %v1810 = vrot.slane %v1809, 4
  %v1811 = vmax.f32 %v1809, %v1810
  %v1812 = vrot.slane %v1811, 2
  %v1813 = vmax.f32 %v1811, %v1812
  %v1814 = vrot.slane %v1813, 1
  %v1815 = vmax.f32 %v1813, %v1814
  %v1816 = vpack.c.bf16 %v1808, %v1808
  %v1817 = vpack.c.bf16 %v1815, %v1815
  %v1818 = vld [vmem:[%s20] sm:$0xf]
  %v1819 = vld [vmem:[%s20 + $0x4] sm:$0xf]
  %v1820 = vld [vmem:[%s21] sm:$0x1]
  %v1822 = vlaneseq
  %v1823 = vshrl.u32 %v1822, 7
  %v1824 = vsub.s32 0, %v1823
  %v1825 = vrot.slane %v1820, %v1824
  %v1829 = vunpack.c.l.b16 %v1816
  %v1830 = vunpack.c.l.b16 %v1817
  %v1831 = vsel %vm487, %v1830, %v1829
  %v1832 = vpack.c.b16 %v1831, %v1831
  %v1835 = vunpack.c.l.b16 %v1818
  %v1836 = vunpack.c.l.b16 %v1819
  %v1837 = vpack.c.b16 %v1836, %v1835
  %v1840 = vsel %vm180, %v1832, 0
  %1842 = vmatprep.subr.bf16.mxu0 0
  %1843 = vmatpush1.bf16.msra.mxu0 %v1837
  %1844 = vmatprep.subr.bf16.mxu0 0
  %1845 = vmatpush1.bf16.msra.mxu0 0
  %1846 = vmatprep.subr.bf16.mxu0 0
  %1847 = vmatpush1.bf16.msra.mxu0 0
  %1848 = vmatprep.subr.bf16.mxu0 0
  %1849 = vmatpush1.bf16.msra.mxu0 0
  %1850 = vmatprep.subr.bf16.mxu0 0
  %1851 = vmatpush1.bf16.msra.mxu0 0
  %1852 = vmatprep.subr.bf16.mxu0 0
  %1853 = vmatpush1.bf16.msra.mxu0 0
  %1854 = vmatprep.subr.bf16.mxu0 0
  %1855 = vmatpush1.bf16.msra.mxu0 0
  %1856 = vmatprep.subr.bf16.mxu0 0
  %1857 = vmatpush1.bf16.msra.mxu0 0
  %1858 = vmatprep.subr.bf16.mxu0 0
  %1859 = vmatpush1.bf16.msra.mxu0 0
  %1860 = vmatprep.subr.bf16.mxu0 0
  %1861 = vmatpush1.bf16.msra.mxu0 0
  %1862 = vmatprep.subr.bf16.mxu0 0
  %1863 = vmatpush1.bf16.msra.mxu0 0
  %1864 = vmatprep.subr.bf16.mxu0 0
  %1865 = vmatpush1.bf16.msra.mxu0 0
  %1866 = vmatprep.subr.bf16.mxu0 0
  %1867 = vmatpush1.bf16.msra.mxu0 0
  %1868 = vmatprep.subr.bf16.mxu0 0
  %1869 = vmatpush1.bf16.msra.mxu0 0
  %1870 = vmatprep.subr.bf16.mxu0 0
  %1871 = vmatpush1.bf16.msra.mxu0 0
  %1872 = vmatprep.subr.bf16.mxu0 0
  %1873 = vmatpush1.bf16.msra.mxu0 0
  %1874 = vmatprep.mubr.bf16.mxu0 0
  %1875 = vmatmul.mubr.bf16.gmra.mrb[0].mxu0 %v1840
  %v1876 = vpop.f32.mrb[0].mxu0
  %v1877 = vadd.f32 %v1825, %v1876
  %v1878 = vpop.f32.mrb[0].mxu0
  %v1879 = vpop.f32.mrb[0].mxu0
  %v1880 = vpop.f32.mrb[0].mxu0
  %1881 = vdwg.mxu0
  %vm1882 = vcmask 25600
  %v1883 = vsel %vm1882, %v1877, -inf
  %1884 = vmax.xlane.f32.xlu0 %v1883
  %v1885 = vpop.xlane.xlu0 %1884
  %v1886 = vsub.f32 %v1877, %v1885
  %v1887 = vmul.f32 %v1886, 1.442695
  %v1888 = vpow.pop %v1887
  %v1889 = vsel %vm1882, %v1888, 0.0
  %1890 = vadd.xlane.f32.xlu0 %v1889
  %v1891 = vpop.xlane.xlu0 %1890
  %v1892 = vrcp.pop %v1891
  %v1893 = vmul.f32 %v1888, %v1892
  %1894 = vrot.lane.b32.xlu0 %v1694, 80
  %v1895 = vpop.permute.xlu0 %1894
  %1896 = vrot.lane.b32.xlu0 %v1695, 80
  %v1897 = vpop.permute.xlu0 %1896
  %1900 = vrot.lane.b32.xlu0 %v1683, 96
  %v1901 = vpop.permute.xlu0 %1900
  %1902 = vrot.lane.b32.xlu0 %v1684, 96
  %v1903 = vpop.permute.xlu0 %1902
  %1908 = vrot.lane.b32.xlu0 %v1703, 112
  %v1909 = vpop.permute.xlu0 %1908
  %1910 = vrot.lane.b32.xlu0 %v1704, 112
  %v1911 = vpop.permute.xlu0 %1910
  %v1914 = vsel %vm180, %v1895, %v1901
  %v1915 = vsel %vm180, %v1897, %v1903
  %v1916 = vsel %vm119, %v1914, %v1909
  %v1917 = vsel %vm119, %v1915, %v1911
  %v1918 = vpack.c.bf16 %v1917, %v1916
  %v1919 = vld [vmem:[%s22] sm:$0xf]
  %v1920 = vld [vmem:[%s22 + $0x4] sm:$0xf]
  %v1921 = vld [vmem:[%s22 + $0x8] sm:$0xf]
  %v1922 = vld [vmem:[%s22 + $0xc] sm:$0xf]
  %v1923 = vld [vmem:[%s22 + $0x10] sm:$0xf]
  %v1924 = vld [vmem:[%s22 + $0x14] sm:$0xf]
  %v1925 = vld [vmem:[%s23] sm:$0x1]
  %v1927 = vlaneseq
  %v1928 = vshrl.u32 %v1927, 7
  %v1929 = vsub.s32 0, %v1928
  %v1930 = vrot.slane %v1925, %v1929
  %v1938 = vunpack.c.l.b16 %v1919
  %v1939 = vunpack.c.l.b16 %v1920
  %v1940 = vunpack.c.l.b16 %v1921
  %v1941 = vunpack.c.l.b16 %v1922
  %v1942 = vunpack.c.l.b16 %v1923
  %v1943 = vunpack.c.l.b16 %v1924
  %v1944 = vpack.c.b16 %v1939, %v1938
  %v1945 = vpack.c.b16 %v1941, %v1940
  %v1946 = vpack.c.b16 %v1943, %v1942
  %v1951 = vsel %vm1755, %v1918, 0
  %1953 = vmatprep.subr.bf16.mxu0 0
  %1954 = vmatpush1.bf16.msra.mxu0 %v1944
  %1955 = vmatprep.subr.bf16.mxu0 0
  %1956 = vmatpush1.bf16.msra.mxu0 %v1945
  %1957 = vmatprep.subr.bf16.mxu0 0
  %1958 = vmatpush1.bf16.msra.mxu0 %v1946
  %1959 = vmatprep.subr.bf16.mxu0 0
  %1960 = vmatpush1.bf16.msra.mxu0 0
  %1961 = vmatprep.subr.bf16.mxu0 0
  %1962 = vmatpush1.bf16.msra.mxu0 0
  %1963 = vmatprep.subr.bf16.mxu0 0
  %1964 = vmatpush1.bf16.msra.mxu0 0
  %1965 = vmatprep.subr.bf16.mxu0 0
  %1966 = vmatpush1.bf16.msra.mxu0 0
  %1967 = vmatprep.subr.bf16.mxu0 0
  %1968 = vmatpush1.bf16.msra.mxu0 0
  %1969 = vmatprep.subr.bf16.mxu0 0
  %1970 = vmatpush1.bf16.msra.mxu0 0
  %1971 = vmatprep.subr.bf16.mxu0 0
  %1972 = vmatpush1.bf16.msra.mxu0 0
  %1973 = vmatprep.subr.bf16.mxu0 0
  %1974 = vmatpush1.bf16.msra.mxu0 0
  %1975 = vmatprep.subr.bf16.mxu0 0
  %1976 = vmatpush1.bf16.msra.mxu0 0
  %1977 = vmatprep.subr.bf16.mxu0 0
  %1978 = vmatpush1.bf16.msra.mxu0 0
  %1979 = vmatprep.subr.bf16.mxu0 0
  %1980 = vmatpush1.bf16.msra.mxu0 0
  %1981 = vmatprep.subr.bf16.mxu0 0
  %1982 = vmatpush1.bf16.msra.mxu0 0
  %1983 = vmatprep.subr.bf16.mxu0 0
  %1984 = vmatpush1.bf16.msra.mxu0 0
  %1985 = vmatprep.mubr.bf16.mxu0 0
  %1986 = vmatmul.mubr.bf16.gmra.mrb[0].mxu0 %v1951
  %v1987 = vpop.f32.mrb[0].mxu0
  %v1988 = vadd.f32 %v1930, %v1987
  %v1989 = vpop.f32.mrb[0].mxu0
  %v1990 = vpop.f32.mrb[0].mxu0
  %v1991 = vadd.f32 %v1930, %v1990
  %v1992 = vpop.f32.mrb[0].mxu0
  %1993 = vdwg.mxu0
  %v1994 = vmax.f32 %v1988, 0.0
  %v1995 = vmax.f32 %v1991, 0.0
  %v1996 = vsel %vm180, %v1994, -inf
  %v1997 = vrot.slane %v1996, 4
  %v1998 = vmax.f32 %v1996, %v1997
  %v1999 = vrot.slane %v1998, 2
  %v2000 = vmax.f32 %v1998, %v1999
  %v2001 = vrot.slane %v2000, 1
  %v2002 = vmax.f32 %v2000, %v2001
  %v2003 = vsel %vm180, %v1995, -inf
  %v2004 = vrot.slane %v2003, 4
  %v2005 = vmax.f32 %v2003, %v2004
  %v2006 = vrot.slane %v2005, 2
  %v2007 = vmax.f32 %v2005, %v2006
  %v2008 = vrot.slane %v2007, 1
  %v2009 = vmax.f32 %v2007, %v2008
  %v2010 = vpack.c.bf16 %v2002, %v2002
  %v2011 = vpack.c.bf16 %v2009, %v2009
  %v2012 = vld [vmem:[%s24] sm:$0xf]
  %v2013 = vld [vmem:[%s24 + $0x4] sm:$0xf]
  %v2014 = vld [vmem:[%s25] sm:$0x1]
  %v2016 = vlaneseq
  %v2017 = vshrl.u32 %v2016, 7
  %v2018 = vsub.s32 0, %v2017
  %v2019 = vrot.slane %v2014, %v2018
  %v2023 = vunpack.c.l.b16 %v2010
  %v2024 = vunpack.c.l.b16 %v2011
  %v2025 = vsel %vm487, %v2024, %v2023
  %v2026 = vpack.c.b16 %v2025, %v2025
  %v2029 = vunpack.c.l.b16 %v2012
  %v2030 = vunpack.c.l.b16 %v2013
  %v2031 = vpack.c.b16 %v2030, %v2029
  %v2034 = vsel %vm180, %v2026, 0
  %2036 = vmatprep.subr.bf16.mxu0 0
  %2037 = vmatpush1.bf16.msra.mxu0 %v2031
  %2038 = vmatprep.subr.bf16.mxu0 0
  %2039 = vmatpush1.bf16.msra.mxu0 0
  %2040 = vmatprep.subr.bf16.mxu0 0
  %2041 = vmatpush1.bf16.msra.mxu0 0
  %2042 = vmatprep.subr.bf16.mxu0 0
  %2043 = vmatpush1.bf16.msra.mxu0 0
  %2044 = vmatprep.subr.bf16.mxu0 0
  %2045 = vmatpush1.bf16.msra.mxu0 0
  %2046 = vmatprep.subr.bf16.mxu0 0
  %2047 = vmatpush1.bf16.msra.mxu0 0
  %2048 = vmatprep.subr.bf16.mxu0 0
  %2049 = vmatpush1.bf16.msra.mxu0 0
  %2050 = vmatprep.subr.bf16.mxu0 0
  %2051 = vmatpush1.bf16.msra.mxu0 0
  %2052 = vmatprep.subr.bf16.mxu0 0
  %2053 = vmatpush1.bf16.msra.mxu0 0
  %2054 = vmatprep.subr.bf16.mxu0 0
  %2055 = vmatpush1.bf16.msra.mxu0 0
  %2056 = vmatprep.subr.bf16.mxu0 0
  %2057 = vmatpush1.bf16.msra.mxu0 0
  %2058 = vmatprep.subr.bf16.mxu0 0
  %2059 = vmatpush1.bf16.msra.mxu0 0
  %2060 = vmatprep.subr.bf16.mxu0 0
  %2061 = vmatpush1.bf16.msra.mxu0 0
  %2062 = vmatprep.subr.bf16.mxu0 0
  %2063 = vmatpush1.bf16.msra.mxu0 0
  %2064 = vmatprep.subr.bf16.mxu0 0
  %2065 = vmatpush1.bf16.msra.mxu0 0
  %2066 = vmatprep.subr.bf16.mxu0 0
  %2067 = vmatpush1.bf16.msra.mxu0 0
  %2068 = vmatprep.mubr.bf16.mxu0 0
  %2069 = vmatmul.mubr.bf16.gmra.mrb[0].mxu0 %v2034
  %v2070 = vpop.f32.mrb[0].mxu0
  %v2071 = vadd.f32 %v2019, %v2070
  %v2072 = vpop.f32.mrb[0].mxu0
  %v2073 = vpop.f32.mrb[0].mxu0
  %v2074 = vpop.f32.mrb[0].mxu0
  %2075 = vdwg.mxu0
  %v2076 = vsel %vm1882, %v2071, -inf
  %2077 = vmax.xlane.f32.xlu0 %v2076
  %v2078 = vpop.xlane.xlu0 %2077
  %v2079 = vsub.f32 %v2071, %v2078
  %v2080 = vmul.f32 %v2079, 1.442695
  %v2081 = vpow.pop %v2080
  %v2082 = vsel %vm1882, %v2081, 0.0
  %2083 = vadd.xlane.f32.xlu0 %v2082
  %v2084 = vpop.xlane.xlu0 %2083
  %v2085 = vrcp.pop %v2084
  %v2086 = vmul.f32 %v2081, %v2085
  %v2087 = vmul.f32 %v343, %v1676
  %v2088 = vmul.f32 %v346, %v1681
  %vm2089 = vcmask 31744
  %v2090 = vsel %vm2089, %v2087, 0.0
  %v2091 = vrot.slane %v2090, 4
  %v2092 = vadd.f32 %v2090, %v2091
  %v2093 = vrot.slane %v2092, 2
  %v2094 = vadd.f32 %v2092, %v2093
  %v2095 = vrot.slane %v2094, 1
  %v2096 = vadd.f32 %v2094, %v2095
  %v2097 = vsel %vm2089, %v2088, 0.0
  %v2098 = vrot.slane %v2097, 4
  %v2099 = vadd.f32 %v2097, %v2098
  %v2100 = vrot.slane %v2099, 2
  %v2101 = vadd.f32 %v2099, %v2100
  %v2102 = vrot.slane %v2101, 1
  %v2103 = vadd.f32 %v2101, %v2102
  %v2106 = vsel %vm487, %v2103, %v2096
  %v2108 = vsel %vm1882, %v2106, -inf
  %2109 = vmax.xlane.f32.xlu0 %v2108
  %v2110 = vpop.xlane.xlu0 %2109
  %v2112 = vrot.slane %v2110, 1
  %v2115 = vsub.f32 %v2096, %v2110
  %v2116 = vsub.f32 %v2103, %v2112
  %v2117 = vmul.f32 %v2115, 1.442695
  %v2118 = vpow.pop %v2117
  %v2119 = vmul.f32 %v2116, 1.442695
  %v2120 = vpow.pop %v2119
  %v2123 = vrot.slane %v2120, 7
  %v2124 = vsel %vm487, %v2123, %v2118
  %v2126 = vsel %vm1882, %v2124, 0.0
  %2127 = vadd.xlane.f32.xlu0 %v2126
  %v2128 = vpop.xlane.xlu0 %2127
  %v2130 = vrot.slane %v2128, 1
  %v2133 = vrcp.pop %v2128
  %v2134 = vmul.f32 %v2118, %v2133
  %v2135 = vrcp.pop %v2130
  %v2136 = vmul.f32 %v2120, %v2135
  %v2139 = vunpack.c.l.s4 1966171168
  %v2140 = vunpack.c.0.s8 %v2139
  %v2141 = vlaneseq
  %v2142 = vshrl.u32 %v2141, 7
  %v2143 = vsub.s32 %v2140, %v2142
  %v2144 = vrot.slane %v1893, %v2143
  %v2145 = vcombine.high %v2144, %v2144
  %v2147 = vunpack.c.l.s4 1966171168
  %v2148 = vunpack.c.0.s8 %v2147
  %v2149 = vlaneseq
  %v2150 = vshrl.u32 %v2149, 7
  %v2151 = vsub.s32 %v2148, %v2150
  %v2152 = vrot.slane %v2144, %v2151
  %v2154 = vunpack.c.l.s4 1966171168
  %v2155 = vunpack.c.0.s8 %v2154
  %v2156 = vlaneseq
  %v2157 = vshrl.u32 %v2156, 7
  %v2158 = vsub.s32 %v2155, %v2157
  %v2159 = vrot.slane %v2145, %v2158
  %v2162 = vunpack.c.l.s4 1966171168
  %v2163 = vunpack.c.0.s8 %v2162
  %v2164 = vlaneseq
  %v2165 = vshrl.u32 %v2164, 7
  %v2166 = vsub.s32 %v2163, %v2165
  %v2167 = vrot.slane %v2086, %v2166
  %v2168 = vcombine.high %v2167, %v2167
  %v2170 = vunpack.c.l.s4 1966171168
  %v2171 = vunpack.c.0.s8 %v2170
  %v2172 = vlaneseq
  %v2173 = vshrl.u32 %v2172, 7
  %v2174 = vsub.s32 %v2171, %v2173
  %v2175 = vrot.slane %v2167, %v2174
  %v2177 = vunpack.c.l.s4 1966171168
  %v2178 = vunpack.c.0.s8 %v2177
  %v2179 = vlaneseq
  %v2180 = vshrl.u32 %v2179, 7
  %v2181 = vsub.s32 %v2178, %v2180
  %v2182 = vrot.slane %v2168, %v2181
  %v2183 = vlaneseq
  %v2184 = vshrl.u32 %v2183, 7
  %v2185 = vsub.s32 0, %v2184
  %v2186 = vrot.slane %v2152, %v2185
  %v2187 = vlaneseq
  %v2188 = vshrl.u32 %v2187, 7
  %v2189 = vsub.s32 0, %v2188
  %v2190 = vrot.slane %v2159, %v2189
  %v2193 = vlaneseq
  %v2194 = vshrl.u32 %v2193, 7
  %v2195 = vsub.s32 0, %v2194
  %v2196 = vrot.slane %v2175, %v2195
  %v2197 = vlaneseq
  %v2198 = vshrl.u32 %v2197, 7
  %v2199 = vsub.s32 0, %v2198
  %v2200 = vrot.slane %v2182, %v2199
  %v2205 = vrot.slane %v343, 5
  %v2206 = vrot.slane %v346, 5
  %v2209 = vsel %vm1361, %v2134, %v2186
  %v2210 = vsel %vm1361, %v2136, %v2190
  %v2211 = vsel %vm1364, %v2209, %v2196
  %v2212 = vsel %vm1364, %v2210, %v2200
  %v2213 = vsel %vm1367, %v2211, %v2205
  %v2214 = vsel %vm1367, %v2212, %v2206
  %2215 = vst.msk [vmem:[%s26] sm:$0xff] %vm2089, %v2213
  %vm2216 = vcmask 26624
  %2217 = vst.msk [vmem:[%s26 + $0x8] sm:$0x7] %vm2216, %v2205
  %2218 = vst.msk [vmem:[%s26 + $0x10] sm:$0xff] %vm2089, %v2214
  %2219 = vst.msk [vmem:[%s26 + $0x18] sm:$0x7] %vm2216, %v2206
  // Predicated region
  $region106: #{model_forward.1} parent=0 // pred_check
    _
  $region107: #{model_forward.1} parent=0 // pred_check_branch
    %2221 = sbr.rel (0) target = $region109
  $region108: #{model_forward.1} parent=0 // pred_region
    _
  $region109: #{model_forward.1} parent=0 // pred_fallthru
    _
  // Predicated region
  $region110: #{model_forward.1} parent=0 // pred_check
    _
  $region111: #{model_forward.1} parent=0 // pred_check_branch
    %2223 = sbr.rel (0) target = $region113
  $region112: #{model_forward.1} parent=0 // pred_region
    _
  $region113: #{model_forward.1} parent=0 // pred_fallthru
    _

</llo_original>
